<compile_context>
chip_gen: v5e
topology: v5e:2x2
jax: 0.10.0
libtpu: 0.0.40
codegen_flags: <defaults>
</compile_context>

<pallas_src>
import math

import jax
import jax.numpy as jnp
from jax import lax
from jax.experimental import pallas as pl
from jax.experimental.pallas import tpu as pltpu


# ------------------------- bi-directional LSTM stack -------------------------

def _make_bilstm_stack_kernel(T, B, dims):
    """Kernel for one multi-layer LSTM chain.  Grid axis 0 = direction.

    Per-direction refs (leading direction dim squeezed away via None blocks):
      x_ref:               (T, B, dims[0])
      wih_l, whh_l, b_l:   (dims[l], 4H_l), (H_l, 4H_l), (1, 4H_l)   l=0..L-1
      out_ref:             (T, B, dims[-1])
      scratch:             xg_l (T, B, 4H_l) for every layer,
                           hid_l (T, B, H_l) for l < L-1.
    Gate order is (i, f, o, g): one contiguous sigmoid over 3H lanes + tanh.
    """
    L = len(dims) - 1

    def kernel(*refs):
        x_ref = refs[0]
        w_refs = refs[1:1 + 3 * L]
        out_ref = refs[1 + 3 * L]
        scratch = refs[2 + 3 * L:]
        xg_refs = scratch[:L]
        hid_refs = list(scratch[L:]) + [out_ref]

        cur = x_ref
        for l in range(L):
            H = dims[l + 1]
            wih = w_refs[3 * l][...]        # (Fin, 4H)
            whh = w_refs[3 * l + 1][...]    # (H, 4H)
            b = w_refs[3 * l + 2][...]      # (1, 4H)
            xg_ref = xg_refs[l]
            h_out_ref = hid_refs[l]

            # Input contribution for every timestep, hoisted out of the
            # recurrence (independent matmuls pipeline freely on the MXU).
            def pre_step(t, carry):
                xg_ref[t] = (jnp.dot(cur[t], wih,
                                     preferred_element_type=jnp.float32) + b)
                return carry

            lax.fori_loop(0, T, pre_step, 0)

            # Sequential recurrence: only the recurrent dot is serial.
            def rec_step(t, carry):
                h, c = carry
                g = xg_ref[t] + jnp.dot(h, whh,
                                        preferred_element_type=jnp.float32)
                sg = jax.nn.sigmoid(g[:, :3 * H])
                i_g = sg[:, 0 * H:1 * H]
                f_g = sg[:, 1 * H:2 * H]
                o_g = sg[:, 2 * H:3 * H]
                g_g = jnp.tanh(g[:, 3 * H:])
                c_new = f_g * c + i_g * g_g
                h_new = o_g * jnp.tanh(c_new)
                h_out_ref[t] = h_new
                return (h_new, c_new)

            init = (jnp.zeros((B, H), jnp.float32),
                    jnp.zeros((B, H), jnp.float32))
            lax.fori_loop(0, T, rec_step, init)
            cur = h_out_ref

    return kernel


def bilstm_stack(x_tbf, fw_params, bw_params):
    """x_tbf: (T, B, F) time-major input.  *_params: list over layers of
    (w_ih_t (Fin,4H), w_hh_t (H,4H), bias (1,4H)).  Returns (2, T, B, H_last):
    [0] = forward chain on x, [1] = chain on the feature-flipped input
    (reproduces the reference's x.flip(-1))."""
    T, B, F = x_tbf.shape
    dims = [F] + [p[1].shape[0] for p in fw_params]
    L = len(fw_params)
    H_last = dims[-1]

    xs = jnp.stack([x_tbf, jnp.flip(x_tbf, axis=-1)], axis=0)   # (2,T,B,F)

    inputs = [xs]
    in_specs = [pl.BlockSpec((None, T, B, F), lambda d: (d, 0, 0, 0))]
    for l in range(L):
        for comp in range(3):
            w = jnp.stack([fw_params[l][comp], bw_params[l][comp]], axis=0)
            inputs.append(w)
            in_specs.append(
                pl.BlockSpec((None,) + fw_params[l][comp].shape,
                             lambda d: (d, 0, 0)))

    scratch = [pltpu.VMEM((T, B, 4 * dims[l + 1]), jnp.float32)
               for l in range(L)]
    scratch += [pltpu.VMEM((T, B, dims[l + 1]), jnp.float32)
                for l in range(L - 1)]

    return pl.pallas_call(
        _make_bilstm_stack_kernel(T, B, tuple(dims)),
        out_shape=jax.ShapeDtypeStruct((2, T, B, H_last), jnp.float32),
        grid=(2,),
        in_specs=in_specs,
        out_specs=pl.BlockSpec((None, T, B, H_last), lambda d: (d, 0, 0, 0)),
        scratch_shapes=scratch,
        compiler_params=pltpu.CompilerParams(
            dimension_semantics=("parallel",)),
    )(*inputs)


# ---------------- fused QKV projection + attention + output -----------------

def _make_attn_kernel(num_heads):
    def kernel(x_ref, wqkv_ref, bqkv_ref, wo_ref, bo_ref, wa_ref, ba_ref,
               o_ref):
        B, T, _ = x_ref.shape
        E = wo_ref.shape[0]
        hd = E // num_heads
        scale = 1.0 / math.sqrt(hd)

        wqkv = wqkv_ref[...]
        bqkv = bqkv_ref[...]
        wo = wo_ref[...]
        bo = bo_ref[...]
        wa = wa_ref[...]
        ba = ba_ref[...]

        def body(b, carry):
            xb = x_ref[b]                                          # (T, Hl)
            qkv = jnp.dot(xb, wqkv,
                          preferred_element_type=jnp.float32) + bqkv   # (T,3E)
            q = qkv[:, 0 * E:1 * E]
            k = qkv[:, 1 * E:2 * E]
            v = qkv[:, 2 * E:3 * E]
            acc = jnp.zeros((T, E), jnp.float32)
            for h in range(num_heads):
                lo, hi = h * hd, (h + 1) * hd
                qh = q[:, lo:hi] * scale
                kh = k[:, lo:hi]
                vh = v[:, lo:hi]
                # q @ k^T via dot_general (no explicit transpose).
                s = lax.dot_general(qh, kh, (((1,), (1,)), ((), ())),
                                    preferred_element_type=jnp.float32)
                s = s - jnp.max(s, axis=-1, keepdims=True)
                p = jnp.exp(s)
                inv = pl.reciprocal(jnp.sum(p, axis=-1, keepdims=True),
                                    approx=True)
                oh = jnp.dot(p, vh, preferred_element_type=jnp.float32) * inv
                # out_proj applied per head slice == out_proj(concat(heads)).
                acc = acc + jnp.dot(oh, wo[lo:hi, :],
                                    preferred_element_type=jnp.float32)
            att = acc + bo                                          # (T, E)
            y = jnp.dot(att, wa, preferred_element_type=jnp.float32) + ba
            o_ref[b] = y
            return carry

        lax.fori_loop(0, B, body, 0)

    return kernel


def attention_block(x_bth, wqkv, bqkv, wo, bo, wa, ba, num_heads):
    B, T, _ = x_bth.shape
    out_dim = wa.shape[1]
    return pl.pallas_call(
        _make_attn_kernel(num_heads),
        out_shape=jax.ShapeDtypeStruct((B, T, out_dim), jnp.float32),
    )(x_bth, wqkv, bqkv, wo, bo, wa, ba)


# --------------------------------- decoder ----------------------------------

def _dec_kernel(x_ref, w_ref, b_ref, o_ref):
    o_ref[...] = (jnp.dot(x_ref[...], w_ref[...],
                          preferred_element_type=jnp.float32) + b_ref[...])


def decode(x_2d, w, b):
    N = x_2d.shape[0]
    return pl.pallas_call(
        _dec_kernel,
        out_shape=jax.ShapeDtypeStruct((N, w.shape[1]), jnp.float32),
    )(x_2d, w, b)


# --------------------------- Parameter creation ----------------------------

def _init_linear(key, fin, fout, scale=0.1):
    kw, kb = jax.random.split(key)
    w_t = jax.random.normal(kw, (fin, fout), jnp.float32) * scale
    b = jax.random.normal(kb, (1, fout), jnp.float32) * scale
    return w_t, b


def _init_lstm(key, fin, hidden, scale=0.1):
    # Gate columns ordered (i, f, o, g); weights are random so only the
    # in-kernel slicing convention matters.
    k1, k2, k3 = jax.random.split(key, 3)
    w_ih_t = jax.random.normal(k1, (fin, 4 * hidden), jnp.float32) * scale
    w_hh_t = jax.random.normal(k2, (hidden, 4 * hidden), jnp.float32) * scale
    bias = jax.random.normal(k3, (1, 4 * hidden), jnp.float32) * scale
    return w_ih_t, w_hh_t, bias


def init_deepptm_params(key, in_feat, lstm_width, attn_dim, num_heads,
                        attn_out_dim):
    keys = iter(jax.random.split(key, 64))
    nxt = lambda: next(keys)
    params = {}
    dims_in = [in_feat] + lstm_width[:-1]
    params['in_lstm_fw'] = [_init_lstm(nxt(), d, h)
                            for d, h in zip(dims_in, lstm_width)]
    params['in_lstm_bw'] = [_init_lstm(nxt(), d, h)
                            for d, h in zip(dims_in, lstm_width)]
    H_last = lstm_width[-1]
    params['val_enc'] = [_init_linear(nxt(), H_last, attn_dim)
                         for _ in range(num_heads)]
    params['key_enc'] = [_init_linear(nxt(), H_last, attn_dim)
                         for _ in range(num_heads)]
    params['query_enc'] = [_init_linear(nxt(), H_last, attn_dim)
                           for _ in range(num_heads)]
    E = attn_dim * num_heads
    params['in_proj_q'] = _init_linear(nxt(), E, E)
    params['in_proj_k'] = _init_linear(nxt(), E, E)
    params['in_proj_v'] = _init_linear(nxt(), E, E)
    params['out_proj'] = _init_linear(nxt(), E, E)
    params['attn_out'] = _init_linear(nxt(), E, attn_out_dim)
    dims_out = [attn_out_dim] + lstm_width[:-1]
    params['out_lstm_fw'] = [_init_lstm(nxt(), d, h)
                             for d, h in zip(dims_out, lstm_width)]
    params['out_lstm_bw'] = [_init_lstm(nxt(), d, h)
                             for d, h in zip(dims_out, lstm_width)]
    params['dec'] = _init_linear(nxt(), H_last, 1)
    return params


# ------------------------------ Forward pass -------------------------------

def _fuse_qkv_weights(params, num_heads):
    """Compose per-head encoders with the MHA in-projections into one
    (H_last, 3E) weight / (1, 3E) bias (linear-map composition; identical
    semantics to running them as two separate linear layers)."""
    def compose(enc_list, in_proj):
        w_enc = jnp.concatenate([enc_list[i][0] for i in range(num_heads)],
                                axis=1)                  # (H_last, E)
        b_enc = jnp.concatenate([enc_list[i][1] for i in range(num_heads)],
                                axis=1)                  # (1, E)
        w_in, b_in = in_proj
        return w_enc @ w_in, b_enc @ w_in + b_in

    wq, bq = compose(params['query_enc'], params['in_proj_q'])
    wk, bk = compose(params['key_enc'], params['in_proj_k'])
    wv, bv = compose(params['val_enc'], params['in_proj_v'])
    return (jnp.concatenate([wq, wk, wv], axis=1),
            jnp.concatenate([bq, bk, bv], axis=1))


@jax.jit
def deep_ptm_forward(params, x):
    B, T, _ = x.shape
    num_heads = len(params['val_enc'])

    x_tbf = jnp.transpose(x, (1, 0, 2))                        # (T, B, F)

    # Input bi-LSTM stack (fw + feature-flipped chain), summed.
    h1 = bilstm_stack(x_tbf, params['in_lstm_fw'], params['in_lstm_bw'])
    x1 = h1[0] + h1[1]                                         # (T, B, H_last)

    # Fused per-head encoders + MHA (in_proj, SDPA, out_proj) + attn_out.
    wqkv, bqkv = _fuse_qkv_weights(params, num_heads)
    wo, bo = params['out_proj']
    wa, ba = params['attn_out']
    att = attention_block(jnp.transpose(x1, (1, 0, 2)),
                          wqkv, bqkv, wo, bo, wa, ba, num_heads)  # (B,T,out)

    # Output bi-LSTM stack.
    x2 = jnp.transpose(att, (1, 0, 2))                         # (T, B, out)
    h2 = bilstm_stack(x2, params['out_lstm_fw'], params['out_lstm_bw'])
    xo = h2[0] + h2[1]                                         # (T, B, H_last)

    # Decoder.
    H_last = xo.shape[-1]
    wd, bd = params['dec']
    y = decode(xo.reshape(T * B, H_last), wd, bd)              # (T*B, 1)
    return jnp.transpose(y.reshape(T, B, 1), (1, 0, 2))        # (B, T, 1)


# ---------------------------------- Main ------------------------------------

if __name__ == "__main__":
    B, T = 2, 8
    IN_FEAT = 4
    LSTM_WIDTH = [32, 16]
    ATTN_DIM = 8
    NUM_HEADS = 2
    ATTN_OUT_DIM = 8

    key = jax.random.PRNGKey(0)
    kx, kp = jax.random.split(key)
    x = jax.random.normal(kx, (B, T, IN_FEAT), jnp.float32)
    params = init_deepptm_params(kp, IN_FEAT, LSTM_WIDTH, ATTN_DIM,
                                 NUM_HEADS, ATTN_OUT_DIM)

    out = deep_ptm_forward(params, x)
    out = jax.block_until_ready(out)
    assert out.shape == (B, T, 1), out.shape
    assert bool(jnp.all(jnp.isfinite(out)))
    print("KERNEL_OK")
</pallas_src>

<mosaic_0001>
module attributes {stable_mosaic.version = 11 : i64} {
  func.func @kernel(%arg0: i32, %arg1: memref<1x8x2x4xf32, #tpu.memory_space<vmem>>, %arg2: memref<1x4x128xf32, #tpu.memory_space<vmem>>, %arg3: memref<1x32x128xf32, #tpu.memory_space<vmem>>, %arg4: memref<1x1x128xf32, #tpu.memory_space<vmem>>, %arg5: memref<1x32x64xf32, #tpu.memory_space<vmem>>, %arg6: memref<1x16x64xf32, #tpu.memory_space<vmem>>, %arg7: memref<1x1x64xf32, #tpu.memory_space<vmem>>, %arg8: memref<1x8x2x16xf32, #tpu.memory_space<vmem>>, %arg9: memref<8x2x128xf32, #tpu.memory_space<vmem>>, %arg10: memref<8x2x64xf32, #tpu.memory_space<vmem>>, %arg11: memref<8x2x32xf32, #tpu.memory_space<vmem>>) attributes {dimension_semantics = [#tpu.dimension_semantics<parallel>], iteration_bounds = array<i64: 2>, scalar_prefetch = 0 : i64, scratch_operands = 3 : i64, tpu.core_type = #tpu.core_type<tc>, window_params = [{transform_indices = @transform_0, window_bounds = array<i64: 1, 8, 2, 4>}, {transform_indices = @transform_1, window_bounds = array<i64: 1, 4, 128>}, {transform_indices = @transform_2, window_bounds = array<i64: 1, 32, 128>}, {transform_indices = @transform_3, window_bounds = array<i64: 1, 1, 128>}, {transform_indices = @transform_4, window_bounds = array<i64: 1, 32, 64>}, {transform_indices = @transform_5, window_bounds = array<i64: 1, 16, 64>}, {transform_indices = @transform_6, window_bounds = array<i64: 1, 1, 64>}, {transform_indices = @transform_7, window_bounds = array<i64: 1, 8, 2, 16>}]} {
    %c0 = arith.constant 0 : index
    %c0_0 = arith.constant 0 : index
    %c0_1 = arith.constant 0 : index
    %0 = vector.load %arg2[%c0, %c0_0, %c0_1] : memref<1x4x128xf32, #tpu.memory_space<vmem>>, vector<1x4x128xf32>
    %1 = vector.shape_cast %0 : vector<1x4x128xf32> to vector<4x128xf32>
    %c0_2 = arith.constant 0 : index
    %c0_3 = arith.constant 0 : index
    %c0_4 = arith.constant 0 : index
    %2 = vector.load %arg3[%c0_2, %c0_3, %c0_4] : memref<1x32x128xf32, #tpu.memory_space<vmem>>, vector<1x32x128xf32>
    %3 = vector.shape_cast %2 : vector<1x32x128xf32> to vector<32x128xf32>
    %c0_5 = arith.constant 0 : index
    %c0_6 = arith.constant 0 : index
    %c0_7 = arith.constant 0 : index
    %4 = vector.load %arg4[%c0_5, %c0_6, %c0_7] : memref<1x1x128xf32, #tpu.memory_space<vmem>>, vector<1x1x128xf32>
    %5 = vector.shape_cast %4 : vector<1x1x128xf32> to vector<1x128xf32>
    %c0_i32 = arith.constant 0 : i32
    %c8_i32 = arith.constant 8 : i32
    %6 = arith.addi %c0_i32, %c8_i32 : i32
    %c1_i32 = arith.constant 1 : i32
    scf.for %arg12 = %c0_i32 to %6 step %c1_i32  : i32 {
      %c0_33 = arith.constant 0 : index
      %22 = arith.index_cast %arg12 : i32 to index
      %c0_34 = arith.constant 0 : index
      %c0_35 = arith.constant 0 : index
      %23 = vector.load %arg1[%c0_33, %22, %c0_34, %c0_35] : memref<1x8x2x4xf32, #tpu.memory_space<vmem>>, vector<1x1x2x4xf32>
      %24 = vector.shape_cast %23 : vector<1x1x2x4xf32> to vector<2x4xf32>
      %cst_36 = arith.constant dense<0.000000e+00> : vector<2x128xf32>
      %25 = tpu.matmul %24, %1, %cst_36 {dimension_numbers = #tpu.dot_dimension_numbers<[1], [0], [0], [1], [0, 0, 1, 1], [], []>} : vector<2x4xf32>, vector<4x128xf32>, vector<2x128xf32> -> vector<2x128xf32>
      %26 = vector.broadcast %5 : vector<1x128xf32> to vector<2x128xf32>
      %27 = arith.addf %25, %26 : vector<2x128xf32>
      %28 = arith.index_cast %arg12 : i32 to index
      %c0_37 = arith.constant 0 : index
      %c0_38 = arith.constant 0 : index
      %29 = vector.load %arg9[%28, %c0_37, %c0_38] : memref<8x2x128xf32, #tpu.memory_space<vmem>>, vector<1x2x128xf32>
      %30 = vector.shape_cast %29 : vector<1x2x128xf32> to vector<2x128xf32>
      %31 = vector.shape_cast %27 : vector<2x128xf32> to vector<1x2x128xf32>
      tpu.vector_store %arg9[%28, %c0_37, %c0_38], %31 {strides = array<i32>} : memref<8x2x128xf32, #tpu.memory_space<vmem>>, vector<1x2x128xf32>,
    }
    %c8_i32_8 = arith.constant 8 : i32
    %cst = arith.constant 0.000000e+00 : f32
    %7 = vector.broadcast %cst : f32 to vector<2x32xf32>
    %cst_9 = arith.constant 0.000000e+00 : f32
    %8 = vector.broadcast %cst_9 : f32 to vector<2x32xf32>
    %c0_i32_10 = arith.constant 0 : i32
    %c8_i32_11 = arith.constant 8 : i32
    %9 = arith.addi %c0_i32_10, %c8_i32_11 : i32
    %c1_i32_12 = arith.constant 1 : i32
    %10:2 = scf.for %arg12 = %c0_i32_10 to %9 step %c1_i32_12 iter_args(%arg13 = %7, %arg14 = %8) -> (vector<2x32xf32>, vector<2x32xf32>)  : i32 {
      %22 = arith.index_cast %arg12 : i32 to index
      %c0_33 = arith.constant 0 : index
      %c0_34 = arith.constant 0 : index
      %23 = vector.load %arg9[%22, %c0_33, %c0_34] : memref<8x2x128xf32, #tpu.memory_space<vmem>>, vector<1x2x128xf32>
      %24 = vector.shape_cast %23 : vector<1x2x128xf32> to vector<2x128xf32>
      %cst_35 = arith.constant dense<0.000000e+00> : vector<2x128xf32>
      %25 = tpu.matmul %arg13, %3, %cst_35 {dimension_numbers = #tpu.dot_dimension_numbers<[1], [0], [0], [1], [0, 0, 1, 1], [], []>} : vector<2x32xf32>, vector<32x128xf32>, vector<2x128xf32> -> vector<2x128xf32>
      %26 = arith.addf %24, %25 : vector<2x128xf32>
      %27 = vector.extract_strided_slice %26 {offsets = [0, 0], sizes = [2, 96], strides = [1, 1]} : vector<2x128xf32> to vector<2x96xf32>
      %28 = arith.negf %27 : vector<2x96xf32>
      %29 = math.exp %28 : vector<2x96xf32>
      %cst_36 = arith.constant 1.000000e+00 : f32
      %30 = vector.broadcast %cst_36 : f32 to vector<2x96xf32>
      %31 = arith.addf %30, %29 : vector<2x96xf32>
      %32 = arith.divf %30, %31 : vector<2x96xf32>
      %33 = vector.extract_strided_slice %32 {offsets = [0, 0], sizes = [2, 32], strides = [1, 1]} : vector<2x96xf32> to vector<2x32xf32>
      %34 = vector.extract_strided_slice %32 {offsets = [0, 32], sizes = [2, 32], strides = [1, 1]} : vector<2x96xf32> to vector<2x32xf32>
      %35 = vector.extract_strided_slice %32 {offsets = [0, 64], sizes = [2, 32], strides = [1, 1]} : vector<2x96xf32> to vector<2x32xf32>
      %36 = vector.extract_strided_slice %26 {offsets = [0, 96], sizes = [2, 32], strides = [1, 1]} : vector<2x128xf32> to vector<2x32xf32>
      %37 = math.tanh %36 : vector<2x32xf32>
      %38 = arith.mulf %34, %arg14 : vector<2x32xf32>
      %39 = arith.mulf %33, %37 : vector<2x32xf32>
      %40 = arith.addf %38, %39 : vector<2x32xf32>
      %41 = math.tanh %40 : vector<2x32xf32>
      %42 = arith.mulf %35, %41 : vector<2x32xf32>
      %43 = arith.index_cast %arg12 : i32 to index
      %c0_37 = arith.constant 0 : index
      %c0_38 = arith.constant 0 : index
      %44 = vector.load %arg11[%43, %c0_37, %c0_38] : memref<8x2x32xf32, #tpu.memory_space<vmem>>, vector<1x2x32xf32>
      %45 = vector.shape_cast %44 : vector<1x2x32xf32> to vector<2x32xf32>
      %46 = vector.shape_cast %42 : vector<2x32xf32> to vector<1x2x32xf32>
      tpu.vector_store %arg11[%43, %c0_37, %c0_38], %46 {strides = array<i32>} : memref<8x2x32xf32, #tpu.memory_space<vmem>>, vector<1x2x32xf32>,
      scf.yield %42, %40 : vector<2x32xf32>, vector<2x32xf32>
    }
    %c8_i32_13 = arith.constant 8 : i32
    %c0_14 = arith.constant 0 : index
    %c0_15 = arith.constant 0 : index
    %c0_16 = arith.constant 0 : index
    %11 = vector.load %arg5[%c0_14, %c0_15, %c0_16] : memref<1x32x64xf32, #tpu.memory_space<vmem>>, vector<1x32x64xf32>
    %12 = vector.shape_cast %11 : vector<1x32x64xf32> to vector<32x64xf32>
    %c0_17 = arith.constant 0 : index
    %c0_18 = arith.constant 0 : index
    %c0_19 = arith.constant 0 : index
    %13 = vector.load %arg6[%c0_17, %c0_18, %c0_19] : memref<1x16x64xf32, #tpu.memory_space<vmem>>, vector<1x16x64xf32>
    %14 = vector.shape_cast %13 : vector<1x16x64xf32> to vector<16x64xf32>
    %c0_20 = arith.constant 0 : index
    %c0_21 = arith.constant 0 : index
    %c0_22 = arith.constant 0 : index
    %15 = vector.load %arg7[%c0_20, %c0_21, %c0_22] : memref<1x1x64xf32, #tpu.memory_space<vmem>>, vector<1x1x64xf32>
    %16 = vector.shape_cast %15 : vector<1x1x64xf32> to vector<1x64xf32>
    %c0_i32_23 = arith.constant 0 : i32
    %c8_i32_24 = arith.constant 8 : i32
    %17 = arith.addi %c0_i32_23, %c8_i32_24 : i32
    %c1_i32_25 = arith.constant 1 : i32
    scf.for %arg12 = %c0_i32_23 to %17 step %c1_i32_25  : i32 {
      %22 = arith.index_cast %arg12 : i32 to index
      %c0_33 = arith.constant 0 : index
      %c0_34 = arith.constant 0 : index
      %23 = vector.load %arg11[%22, %c0_33, %c0_34] : memref<8x2x32xf32, #tpu.memory_space<vmem>>, vector<1x2x32xf32>
      %24 = vector.shape_cast %23 : vector<1x2x32xf32> to vector<2x32xf32>
      %cst_35 = arith.constant dense<0.000000e+00> : vector<2x64xf32>
      %25 = tpu.matmul %24, %12, %cst_35 {dimension_numbers = #tpu.dot_dimension_numbers<[1], [0], [0], [1], [0, 0, 1, 1], [], []>} : vector<2x32xf32>, vector<32x64xf32>, vector<2x64xf32> -> vector<2x64xf32>
      %26 = vector.broadcast %16 : vector<1x64xf32> to vector<2x64xf32>
      %27 = arith.addf %25, %26 : vector<2x64xf32>
      %28 = arith.index_cast %arg12 : i32 to index
      %c0_36 = arith.constant 0 : index
      %c0_37 = arith.constant 0 : index
      %29 = vector.load %arg10[%28, %c0_36, %c0_37] : memref<8x2x64xf32, #tpu.memory_space<vmem>>, vector<1x2x64xf32>
      %30 = vector.shape_cast %29 : vector<1x2x64xf32> to vector<2x64xf32>
      %31 = vector.shape_cast %27 : vector<2x64xf32> to vector<1x2x64xf32>
      tpu.vector_store %arg10[%28, %c0_36, %c0_37], %31 {strides = array<i32>} : memref<8x2x64xf32, #tpu.memory_space<vmem>>, vector<1x2x64xf32>,
    }
    %c8_i32_26 = arith.constant 8 : i32
    %cst_27 = arith.constant 0.000000e+00 : f32
    %18 = vector.broadcast %cst_27 : f32 to vector<2x16xf32>
    %cst_28 = arith.constant 0.000000e+00 : f32
    %19 = vector.broadcast %cst_28 : f32 to vector<2x16xf32>
    %c0_i32_29 = arith.constant 0 : i32
    %c8_i32_30 = arith.constant 8 : i32
    %20 = arith.addi %c0_i32_29, %c8_i32_30 : i32
    %c1_i32_31 = arith.constant 1 : i32
    %21:2 = scf.for %arg12 = %c0_i32_29 to %20 step %c1_i32_31 iter_args(%arg13 = %18, %arg14 = %19) -> (vector<2x16xf32>, vector<2x16xf32>)  : i32 {
      %22 = arith.index_cast %arg12 : i32 to index
      %c0_33 = arith.constant 0 : index
      %c0_34 = arith.constant 0 : index
      %23 = vector.load %arg10[%22, %c0_33, %c0_34] : memref<8x2x64xf32, #tpu.memory_space<vmem>>, vector<1x2x64xf32>
      %24 = vector.shape_cast %23 : vector<1x2x64xf32> to vector<2x64xf32>
      %cst_35 = arith.constant dense<0.000000e+00> : vector<2x64xf32>
      %25 = tpu.matmul %arg13, %14, %cst_35 {dimension_numbers = #tpu.dot_dimension_numbers<[1], [0], [0], [1], [0, 0, 1, 1], [], []>} : vector<2x16xf32>, vector<16x64xf32>, vector<2x64xf32> -> vector<2x64xf32>
      %26 = arith.addf %24, %25 : vector<2x64xf32>
      %27 = vector.extract_strided_slice %26 {offsets = [0, 0], sizes = [2, 48], strides = [1, 1]} : vector<2x64xf32> to vector<2x48xf32>
      %28 = arith.negf %27 : vector<2x48xf32>
      %29 = math.exp %28 : vector<2x48xf32>
      %cst_36 = arith.constant 1.000000e+00 : f32
      %30 = vector.broadcast %cst_36 : f32 to vector<2x48xf32>
      %31 = arith.addf %30, %29 : vector<2x48xf32>
      %32 = arith.divf %30, %31 : vector<2x48xf32>
      %33 = vector.extract_strided_slice %32 {offsets = [0, 0], sizes = [2, 16], strides = [1, 1]} : vector<2x48xf32> to vector<2x16xf32>
      %34 = vector.extract_strided_slice %32 {offsets = [0, 16], sizes = [2, 16], strides = [1, 1]} : vector<2x48xf32> to vector<2x16xf32>
      %35 = vector.extract_strided_slice %32 {offsets = [0, 32], sizes = [2, 16], strides = [1, 1]} : vector<2x48xf32> to vector<2x16xf32>
      %36 = vector.extract_strided_slice %26 {offsets = [0, 48], sizes = [2, 16], strides = [1, 1]} : vector<2x64xf32> to vector<2x16xf32>
      %37 = math.tanh %36 : vector<2x16xf32>
      %38 = arith.mulf %34, %arg14 : vector<2x16xf32>
      %39 = arith.mulf %33, %37 : vector<2x16xf32>
      %40 = arith.addf %38, %39 : vector<2x16xf32>
      %41 = math.tanh %40 : vector<2x16xf32>
      %42 = arith.mulf %35, %41 : vector<2x16xf32>
      %c0_37 = arith.constant 0 : index
      %43 = arith.index_cast %arg12 : i32 to index
      %c0_38 = arith.constant 0 : index
      %c0_39 = arith.constant 0 : index
      %44 = vector.load %arg8[%c0_37, %43, %c0_38, %c0_39] : memref<1x8x2x16xf32, #tpu.memory_space<vmem>>, vector<1x1x2x16xf32>
      %45 = vector.shape_cast %44 : vector<1x1x2x16xf32> to vector<2x16xf32>
      %46 = vector.shape_cast %42 : vector<2x16xf32> to vector<1x1x2x16xf32>
      tpu.vector_store %arg8[%c0_37, %43, %c0_38, %c0_39], %46 {strides = array<i32>} : memref<1x8x2x16xf32, #tpu.memory_space<vmem>>, vector<1x1x2x16xf32>,
      scf.yield %42, %40 : vector<2x16xf32>, vector<2x16xf32>
    }
    %c8_i32_32 = arith.constant 8 : i32
    return
  }
  func.func @transform_0(%arg0: i32) -> (i32, i32, i32, i32) {
    %c0_i32 = arith.constant 0 : i32
    %c0_i32_0 = arith.constant 0 : i32
    %c0_i32_1 = arith.constant 0 : i32
    %c0_i32_2 = arith.constant 0 : i32
    return %arg0, %c0_i32, %c0_i32_0, %c0_i32_1 : i32, i32, i32, i32
  }
  func.func @transform_1(%arg0: i32) -> (i32, i32, i32) {
    %c0_i32 = arith.constant 0 : i32
    %c0_i32_0 = arith.constant 0 : i32
    %c0_i32_1 = arith.constant 0 : i32
    return %arg0, %c0_i32, %c0_i32_0 : i32, i32, i32
  }
  func.func @transform_2(%arg0: i32) -> (i32, i32, i32) {
    %c0_i32 = arith.constant 0 : i32
    %c0_i32_0 = arith.constant 0 : i32
    %c0_i32_1 = arith.constant 0 : i32
    return %arg0, %c0_i32, %c0_i32_0 : i32, i32, i32
  }
  func.func @transform_3(%arg0: i32) -> (i32, i32, i32) {
    %c0_i32 = arith.constant 0 : i32
    %c0_i32_0 = arith.constant 0 : i32
    %c0_i32_1 = arith.constant 0 : i32
    return %arg0, %c0_i32, %c0_i32_0 : i32, i32, i32
  }
  func.func @transform_4(%arg0: i32) -> (i32, i32, i32) {
    %c0_i32 = arith.constant 0 : i32
    %c0_i32_0 = arith.constant 0 : i32
    %c0_i32_1 = arith.constant 0 : i32
    return %arg0, %c0_i32, %c0_i32_0 : i32, i32, i32
  }
  func.func @transform_5(%arg0: i32) -> (i32, i32, i32) {
    %c0_i32 = arith.constant 0 : i32
    %c0_i32_0 = arith.constant 0 : i32
    %c0_i32_1 = arith.constant 0 : i32
    return %arg0, %c0_i32, %c0_i32_0 : i32, i32, i32
  }
  func.func @transform_6(%arg0: i32) -> (i32, i32, i32) {
    %c0_i32 = arith.constant 0 : i32
    %c0_i32_0 = arith.constant 0 : i32
    %c0_i32_1 = arith.constant 0 : i32
    return %arg0, %c0_i32, %c0_i32_0 : i32, i32, i32
  }
  func.func @transform_7(%arg0: i32) -> (i32, i32, i32, i32) {
    %c0_i32 = arith.constant 0 : i32
    %c0_i32_0 = arith.constant 0 : i32
    %c0_i32_1 = arith.constant 0 : i32
    %c0_i32_2 = arith.constant 0 : i32
    return %arg0, %c0_i32, %c0_i32_0, %c0_i32_1 : i32, i32, i32, i32
  }
}

module attributes {stable_mosaic.version = 11 : i64} {
  func.func @kernel(%arg0: memref<2x8x16xf32, #tpu.memory_space<vmem>>, %arg1: memref<16x48xf32, #tpu.memory_space<vmem>>, %arg2: memref<1x48xf32, #tpu.memory_space<vmem>>, %arg3: memref<16x16xf32, #tpu.memory_space<vmem>>, %arg4: memref<1x16xf32, #tpu.memory_space<vmem>>, %arg5: memref<16x8xf32, #tpu.memory_space<vmem>>, %arg6: memref<1x8xf32, #tpu.memory_space<vmem>>, %arg7: memref<2x8x8xf32, #tpu.memory_space<vmem>>) attributes {dimension_semantics = [], scalar_prefetch = 0 : i64, scratch_operands = 0 : i64, tpu.core_type = #tpu.core_type<tc>} {
    %c0 = arith.constant 0 : index
    %c0_0 = arith.constant 0 : index
    %0 = vector.load %arg1[%c0, %c0_0] : memref<16x48xf32, #tpu.memory_space<vmem>>, vector<16x48xf32>
    %c0_1 = arith.constant 0 : index
    %c0_2 = arith.constant 0 : index
    %1 = vector.load %arg2[%c0_1, %c0_2] : memref<1x48xf32, #tpu.memory_space<vmem>>, vector<1x48xf32>
    %c0_3 = arith.constant 0 : index
    %c0_4 = arith.constant 0 : index
    %2 = vector.load %arg3[%c0_3, %c0_4] : memref<16x16xf32, #tpu.memory_space<vmem>>, vector<16x16xf32>
    %c0_5 = arith.constant 0 : index
    %c0_6 = arith.constant 0 : index
    %3 = vector.load %arg4[%c0_5, %c0_6] : memref<1x16xf32, #tpu.memory_space<vmem>>, vector<1x16xf32>
    %c0_7 = arith.constant 0 : index
    %c0_8 = arith.constant 0 : index
    %4 = vector.load %arg5[%c0_7, %c0_8] : memref<16x8xf32, #tpu.memory_space<vmem>>, vector<16x8xf32>
    %c0_9 = arith.constant 0 : index
    %c0_10 = arith.constant 0 : index
    %5 = vector.load %arg6[%c0_9, %c0_10] : memref<1x8xf32, #tpu.memory_space<vmem>>, vector<1x8xf32>
    %c0_i32 = arith.constant 0 : i32
    %c2_i32 = arith.constant 2 : i32
    %6 = arith.addi %c0_i32, %c2_i32 : i32
    %c1_i32 = arith.constant 1 : i32
    scf.for %arg8 = %c0_i32 to %6 step %c1_i32  : i32 {
      %7 = arith.index_cast %arg8 : i32 to index
      %c0_12 = arith.constant 0 : index
      %c0_13 = arith.constant 0 : index
      %8 = vector.load %arg0[%7, %c0_12, %c0_13] : memref<2x8x16xf32, #tpu.memory_space<vmem>>, vector<1x8x16xf32>
      %9 = vector.shape_cast %8 : vector<1x8x16xf32> to vector<8x16xf32>
      %cst = arith.constant dense<0.000000e+00> : vector<8x48xf32>
      %10 = tpu.matmul %9, %0, %cst {dimension_numbers = #tpu.dot_dimension_numbers<[1], [0], [0], [1], [0, 0, 1, 1], [], []>} : vector<8x16xf32>, vector<16x48xf32>, vector<8x48xf32> -> vector<8x48xf32>
      %11 = vector.broadcast %1 : vector<1x48xf32> to vector<8x48xf32>
      %12 = arith.addf %10, %11 : vector<8x48xf32>
      %13 = vector.extract_strided_slice %12 {offsets = [0, 0], sizes = [8, 16], strides = [1, 1]} : vector<8x48xf32> to vector<8x16xf32>
      %14 = vector.extract_strided_slice %12 {offsets = [0, 16], sizes = [8, 16], strides = [1, 1]} : vector<8x48xf32> to vector<8x16xf32>
      %15 = vector.extract_strided_slice %12 {offsets = [0, 32], sizes = [8, 16], strides = [1, 1]} : vector<8x48xf32> to vector<8x16xf32>
      %cst_14 = arith.constant 0.000000e+00 : f32
      %16 = vector.broadcast %cst_14 : f32 to vector<8x16xf32>
      %17 = vector.extract_strided_slice %13 {offsets = [0, 0], sizes = [8, 8], strides = [1, 1]} : vector<8x16xf32> to vector<8x8xf32>
      %cst_15 = arith.constant 0.353553385 : f32
      %18 = vector.broadcast %cst_15 : f32 to vector<8x8xf32>
      %19 = arith.mulf %17, %18 : vector<8x8xf32>
      %20 = vector.extract_strided_slice %14 {offsets = [0, 0], sizes = [8, 8], strides = [1, 1]} : vector<8x16xf32> to vector<8x8xf32>
      %21 = vector.extract_strided_slice %15 {offsets = [0, 0], sizes = [8, 8], strides = [1, 1]} : vector<8x16xf32> to vector<8x8xf32>
      %cst_16 = arith.constant dense<0.000000e+00> : vector<8x8xf32>
      %22 = tpu.matmul %19, %20, %cst_16 {dimension_numbers = #tpu.dot_dimension_numbers<[1], [1], [0], [0], [0, 0, 1, 0], [], []>} : vector<8x8xf32>, vector<8x8xf32>, vector<8x8xf32> -> vector<8x8xf32>
      %cst_17 = arith.constant dense<0xFF800000> : vector<8xf32>
      %23 = vector.multi_reduction <maximumf>, %22, %cst_17 [1] : vector<8x8xf32> to vector<8xf32>
      %24 = vector.shape_cast %23 : vector<8xf32> to vector<8x1xf32>
      %25 = vector.broadcast %24 : vector<8x1xf32> to vector<8x8xf32>
      %26 = arith.subf %22, %25 : vector<8x8xf32>
      %27 = math.exp %26 : vector<8x8xf32>
      %cst_18 = arith.constant dense<0.000000e+00> : vector<8xf32>
      %28 = vector.multi_reduction <add>, %27, %cst_18 [1] : vector<8x8xf32> to vector<8xf32>
      %29 = vector.shape_cast %28 : vector<8xf32> to vector<8x1xf32>
      %30 = tpu.reciprocal %29 {approx = true} : vector<8x1xf32> -> vector<8x1xf32>
      %cst_19 = arith.constant dense<0.000000e+00> : vector<8x8xf32>
      %31 = tpu.matmul %27, %21, %cst_19 {dimension_numbers = #tpu.dot_dimension_numbers<[1], [0], [0], [1], [0, 0, 1, 1], [], []>} : vector<8x8xf32>, vector<8x8xf32>, vector<8x8xf32> -> vector<8x8xf32>
      %32 = vector.broadcast %30 : vector<8x1xf32> to vector<8x8xf32>
      %33 = arith.mulf %31, %32 : vector<8x8xf32>
      %34 = vector.extract_strided_slice %2 {offsets = [0, 0], sizes = [8, 16], strides = [1, 1]} : vector<16x16xf32> to vector<8x16xf32>
      %cst_20 = arith.constant dense<0.000000e+00> : vector<8x16xf32>
      %35 = tpu.matmul %33, %34, %cst_20 {dimension_numbers = #tpu.dot_dimension_numbers<[1], [0], [0], [1], [0, 0, 1, 1], [], []>} : vector<8x8xf32>, vector<8x16xf32>, vector<8x16xf32> -> vector<8x16xf32>
      %36 = arith.addf %16, %35 : vector<8x16xf32>
      %37 = vector.extract_strided_slice %13 {offsets = [0, 8], sizes = [8, 8], strides = [1, 1]} : vector<8x16xf32> to vector<8x8xf32>
      %cst_21 = arith.constant 0.353553385 : f32
      %38 = vector.broadcast %cst_21 : f32 to vector<8x8xf32>
      %39 = arith.mulf %37, %38 : vector<8x8xf32>
      %40 = vector.extract_strided_slice %14 {offsets = [0, 8], sizes = [8, 8], strides = [1, 1]} : vector<8x16xf32> to vector<8x8xf32>
      %41 = vector.extract_strided_slice %15 {offsets = [0, 8], sizes = [8, 8], strides = [1, 1]} : vector<8x16xf32> to vector<8x8xf32>
      %cst_22 = arith.constant dense<0.000000e+00> : vector<8x8xf32>
      %42 = tpu.matmul %39, %40, %cst_22 {dimension_numbers = #tpu.dot_dimension_numbers<[1], [1], [0], [0], [0, 0, 1, 0], [], []>} : vector<8x8xf32>, vector<8x8xf32>, vector<8x8xf32> -> vector<8x8xf32>
      %cst_23 = arith.constant dense<0xFF800000> : vector<8xf32>
      %43 = vector.multi_reduction <maximumf>, %42, %cst_23 [1] : vector<8x8xf32> to vector<8xf32>
      %44 = vector.shape_cast %43 : vector<8xf32> to vector<8x1xf32>
      %45 = vector.broadcast %44 : vector<8x1xf32> to vector<8x8xf32>
      %46 = arith.subf %42, %45 : vector<8x8xf32>
      %47 = math.exp %46 : vector<8x8xf32>
      %cst_24 = arith.constant dense<0.000000e+00> : vector<8xf32>
      %48 = vector.multi_reduction <add>, %47, %cst_24 [1] : vector<8x8xf32> to vector<8xf32>
      %49 = vector.shape_cast %48 : vector<8xf32> to vector<8x1xf32>
      %50 = tpu.reciprocal %49 {approx = true} : vector<8x1xf32> -> vector<8x1xf32>
      %cst_25 = arith.constant dense<0.000000e+00> : vector<8x8xf32>
      %51 = tpu.matmul %47, %41, %cst_25 {dimension_numbers = #tpu.dot_dimension_numbers<[1], [0], [0], [1], [0, 0, 1, 1], [], []>} : vector<8x8xf32>, vector<8x8xf32>, vector<8x8xf32> -> vector<8x8xf32>
      %52 = vector.broadcast %50 : vector<8x1xf32> to vector<8x8xf32>
      %53 = arith.mulf %51, %52 : vector<8x8xf32>
      %54 = vector.extract_strided_slice %2 {offsets = [8, 0], sizes = [8, 16], strides = [1, 1]} : vector<16x16xf32> to vector<8x16xf32>
      %cst_26 = arith.constant dense<0.000000e+00> : vector<8x16xf32>
      %55 = tpu.matmul %53, %54, %cst_26 {dimension_numbers = #tpu.dot_dimension_numbers<[1], [0], [0], [1], [0, 0, 1, 1], [], []>} : vector<8x8xf32>, vector<8x16xf32>, vector<8x16xf32> -> vector<8x16xf32>
      %56 = arith.addf %36, %55 : vector<8x16xf32>
      %57 = vector.broadcast %3 : vector<1x16xf32> to vector<8x16xf32>
      %58 = arith.addf %56, %57 : vector<8x16xf32>
      %cst_27 = arith.constant dense<0.000000e+00> : vector<8x8xf32>
      %59 = tpu.matmul %58, %4, %cst_27 {dimension_numbers = #tpu.dot_dimension_numbers<[1], [0], [0], [1], [0, 0, 1, 1], [], []>} : vector<8x16xf32>, vector<16x8xf32>, vector<8x8xf32> -> vector<8x8xf32>
      %60 = vector.broadcast %5 : vector<1x8xf32> to vector<8x8xf32>
      %61 = arith.addf %59, %60 : vector<8x8xf32>
      %62 = arith.index_cast %arg8 : i32 to index
      %c0_28 = arith.constant 0 : index
      %c0_29 = arith.constant 0 : index
      %63 = vector.load %arg7[%62, %c0_28, %c0_29] : memref<2x8x8xf32, #tpu.memory_space<vmem>>, vector<1x8x8xf32>
      %64 = vector.shape_cast %63 : vector<1x8x8xf32> to vector<8x8xf32>
      %65 = vector.shape_cast %61 : vector<8x8xf32> to vector<1x8x8xf32>
      tpu.vector_store %arg7[%62, %c0_28, %c0_29], %65 {strides = array<i32>} : memref<2x8x8xf32, #tpu.memory_space<vmem>>, vector<1x8x8xf32>,
    }
    %c2_i32_11 = arith.constant 2 : i32
    return
  }
}

module attributes {stable_mosaic.version = 11 : i64} {
  func.func @_dec_kernel(%arg0: memref<16x16xf32, #tpu.memory_space<vmem>>, %arg1: memref<16x1xf32, #tpu.memory_space<vmem>>, %arg2: memref<1x1xf32, #tpu.memory_space<vmem>>, %arg3: memref<16x1xf32, #tpu.memory_space<vmem>>) attributes {dimension_semantics = [], scalar_prefetch = 0 : i64, scratch_operands = 0 : i64, tpu.core_type = #tpu.core_type<tc>} {
    %c0 = arith.constant 0 : index
    %c0_0 = arith.constant 0 : index
    %0 = vector.load %arg0[%c0, %c0_0] : memref<16x16xf32, #tpu.memory_space<vmem>>, vector<16x16xf32>
    %c0_1 = arith.constant 0 : index
    %c0_2 = arith.constant 0 : index
    %1 = vector.load %arg1[%c0_1, %c0_2] : memref<16x1xf32, #tpu.memory_space<vmem>>, vector<16x1xf32>
    %cst = arith.constant dense<0.000000e+00> : vector<16x1xf32>
    %2 = tpu.matmul %0, %1, %cst {dimension_numbers = #tpu.dot_dimension_numbers<[1], [0], [0], [1], [0, 0, 1, 1], [], []>} : vector<16x16xf32>, vector<16x1xf32>, vector<16x1xf32> -> vector<16x1xf32>
    %c0_3 = arith.constant 0 : index
    %c0_4 = arith.constant 0 : index
    %3 = vector.load %arg2[%c0_3, %c0_4] : memref<1x1xf32, #tpu.memory_space<vmem>>, vector<1x1xf32>
    %4 = vector.broadcast %3 : vector<1x1xf32> to vector<16x1xf32>
    %5 = arith.addf %2, %4 : vector<16x1xf32>
    %c0_5 = arith.constant 0 : index
    %c0_6 = arith.constant 0 : index
    %6 = vector.load %arg3[%c0_5, %c0_6] : memref<16x1xf32, #tpu.memory_space<vmem>>, vector<16x1xf32>
    tpu.vector_store %arg3[%c0_5, %c0_6], %5 {strides = array<i32>} : memref<16x1xf32, #tpu.memory_space<vmem>>, vector<16x1xf32>,
    return
  }
}

module attributes {stable_mosaic.version = 11 : i64} {
  func.func @kernel(%arg0: i32, %arg1: memref<1x8x2x8xf32, #tpu.memory_space<vmem>>, %arg2: memref<1x8x128xf32, #tpu.memory_space<vmem>>, %arg3: memref<1x32x128xf32, #tpu.memory_space<vmem>>, %arg4: memref<1x1x128xf32, #tpu.memory_space<vmem>>, %arg5: memref<1x32x64xf32, #tpu.memory_space<vmem>>, %arg6: memref<1x16x64xf32, #tpu.memory_space<vmem>>, %arg7: memref<1x1x64xf32, #tpu.memory_space<vmem>>, %arg8: memref<1x8x2x16xf32, #tpu.memory_space<vmem>>, %arg9: memref<8x2x128xf32, #tpu.memory_space<vmem>>, %arg10: memref<8x2x64xf32, #tpu.memory_space<vmem>>, %arg11: memref<8x2x32xf32, #tpu.memory_space<vmem>>) attributes {dimension_semantics = [#tpu.dimension_semantics<parallel>], iteration_bounds = array<i64: 2>, scalar_prefetch = 0 : i64, scratch_operands = 3 : i64, tpu.core_type = #tpu.core_type<tc>, window_params = [{transform_indices = @transform_0, window_bounds = array<i64: 1, 8, 2, 8>}, {transform_indices = @transform_1, window_bounds = array<i64: 1, 8, 128>}, {transform_indices = @transform_2, window_bounds = array<i64: 1, 32, 128>}, {transform_indices = @transform_3, window_bounds = array<i64: 1, 1, 128>}, {transform_indices = @transform_4, window_bounds = array<i64: 1, 32, 64>}, {transform_indices = @transform_5, window_bounds = array<i64: 1, 16, 64>}, {transform_indices = @transform_6, window_bounds = array<i64: 1, 1, 64>}, {transform_indices = @transform_7, window_bounds = array<i64: 1, 8, 2, 16>}]} {
    %c0 = arith.constant 0 : index
    %c0_0 = arith.constant 0 : index
    %c0_1 = arith.constant 0 : index
    %0 = vector.load %arg2[%c0, %c0_0, %c0_1] : memref<1x8x128xf32, #tpu.memory_space<vmem>>, vector<1x8x128xf32>
    %1 = vector.shape_cast %0 : vector<1x8x128xf32> to vector<8x128xf32>
    %c0_2 = arith.constant 0 : index
    %c0_3 = arith.constant 0 : index
    %c0_4 = arith.constant 0 : index
    %2 = vector.load %arg3[%c0_2, %c0_3, %c0_4] : memref<1x32x128xf32, #tpu.memory_space<vmem>>, vector<1x32x128xf32>
    %3 = vector.shape_cast %2 : vector<1x32x128xf32> to vector<32x128xf32>
    %c0_5 = arith.constant 0 : index
    %c0_6 = arith.constant 0 : index
    %c0_7 = arith.constant 0 : index
    %4 = vector.load %arg4[%c0_5, %c0_6, %c0_7] : memref<1x1x128xf32, #tpu.memory_space<vmem>>, vector<1x1x128xf32>
    %5 = vector.shape_cast %4 : vector<1x1x128xf32> to vector<1x128xf32>
    %c0_i32 = arith.constant 0 : i32
    %c8_i32 = arith.constant 8 : i32
    %6 = arith.addi %c0_i32, %c8_i32 : i32
    %c1_i32 = arith.constant 1 : i32
    scf.for %arg12 = %c0_i32 to %6 step %c1_i32  : i32 {
      %c0_33 = arith.constant 0 : index
      %22 = arith.index_cast %arg12 : i32 to index
      %c0_34 = arith.constant 0 : index
      %c0_35 = arith.constant 0 : index
      %23 = vector.load %arg1[%c0_33, %22, %c0_34, %c0_35] : memref<1x8x2x8xf32, #tpu.memory_space<vmem>>, vector<1x1x2x8xf32>
      %24 = vector.shape_cast %23 : vector<1x1x2x8xf32> to vector<2x8xf32>
      %cst_36 = arith.constant dense<0.000000e+00> : vector<2x128xf32>
      %25 = tpu.matmul %24, %1, %cst_36 {dimension_numbers = #tpu.dot_dimension_numbers<[1], [0], [0], [1], [0, 0, 1, 1], [], []>} : vector<2x8xf32>, vector<8x128xf32>, vector<2x128xf32> -> vector<2x128xf32>
      %26 = vector.broadcast %5 : vector<1x128xf32> to vector<2x128xf32>
      %27 = arith.addf %25, %26 : vector<2x128xf32>
      %28 = arith.index_cast %arg12 : i32 to index
      %c0_37 = arith.constant 0 : index
      %c0_38 = arith.constant 0 : index
      %29 = vector.load %arg9[%28, %c0_37, %c0_38] : memref<8x2x128xf32, #tpu.memory_space<vmem>>, vector<1x2x128xf32>
      %30 = vector.shape_cast %29 : vector<1x2x128xf32> to vector<2x128xf32>
      %31 = vector.shape_cast %27 : vector<2x128xf32> to vector<1x2x128xf32>
      tpu.vector_store %arg9[%28, %c0_37, %c0_38], %31 {strides = array<i32>} : memref<8x2x128xf32, #tpu.memory_space<vmem>>, vector<1x2x128xf32>,
    }
    %c8_i32_8 = arith.constant 8 : i32
    %cst = arith.constant 0.000000e+00 : f32
    %7 = vector.broadcast %cst : f32 to vector<2x32xf32>
    %cst_9 = arith.constant 0.000000e+00 : f32
    %8 = vector.broadcast %cst_9 : f32 to vector<2x32xf32>
    %c0_i32_10 = arith.constant 0 : i32
    %c8_i32_11 = arith.constant 8 : i32
    %9 = arith.addi %c0_i32_10, %c8_i32_11 : i32
    %c1_i32_12 = arith.constant 1 : i32
    %10:2 = scf.for %arg12 = %c0_i32_10 to %9 step %c1_i32_12 iter_args(%arg13 = %7, %arg14 = %8) -> (vector<2x32xf32>, vector<2x32xf32>)  : i32 {
      %22 = arith.index_cast %arg12 : i32 to index
      %c0_33 = arith.constant 0 : index
      %c0_34 = arith.constant 0 : index
      %23 = vector.load %arg9[%22, %c0_33, %c0_34] : memref<8x2x128xf32, #tpu.memory_space<vmem>>, vector<1x2x128xf32>
      %24 = vector.shape_cast %23 : vector<1x2x128xf32> to vector<2x128xf32>
      %cst_35 = arith.constant dense<0.000000e+00> : vector<2x128xf32>
      %25 = tpu.matmul %arg13, %3, %cst_35 {dimension_numbers = #tpu.dot_dimension_numbers<[1], [0], [0], [1], [0, 0, 1, 1], [], []>} : vector<2x32xf32>, vector<32x128xf32>, vector<2x128xf32> -> vector<2x128xf32>
      %26 = arith.addf %24, %25 : vector<2x128xf32>
      %27 = vector.extract_strided_slice %26 {offsets = [0, 0], sizes = [2, 96], strides = [1, 1]} : vector<2x128xf32> to vector<2x96xf32>
      %28 = arith.negf %27 : vector<2x96xf32>
      %29 = math.exp %28 : vector<2x96xf32>
      %cst_36 = arith.constant 1.000000e+00 : f32
      %30 = vector.broadcast %cst_36 : f32 to vector<2x96xf32>
      %31 = arith.addf %30, %29 : vector<2x96xf32>
      %32 = arith.divf %30, %31 : vector<2x96xf32>
      %33 = vector.extract_strided_slice %32 {offsets = [0, 0], sizes = [2, 32], strides = [1, 1]} : vector<2x96xf32> to vector<2x32xf32>
      %34 = vector.extract_strided_slice %32 {offsets = [0, 32], sizes = [2, 32], strides = [1, 1]} : vector<2x96xf32> to vector<2x32xf32>
      %35 = vector.extract_strided_slice %32 {offsets = [0, 64], sizes = [2, 32], strides = [1, 1]} : vector<2x96xf32> to vector<2x32xf32>
      %36 = vector.extract_strided_slice %26 {offsets = [0, 96], sizes = [2, 32], strides = [1, 1]} : vector<2x128xf32> to vector<2x32xf32>
      %37 = math.tanh %36 : vector<2x32xf32>
      %38 = arith.mulf %34, %arg14 : vector<2x32xf32>
      %39 = arith.mulf %33, %37 : vector<2x32xf32>
      %40 = arith.addf %38, %39 : vector<2x32xf32>
      %41 = math.tanh %40 : vector<2x32xf32>
      %42 = arith.mulf %35, %41 : vector<2x32xf32>
      %43 = arith.index_cast %arg12 : i32 to index
      %c0_37 = arith.constant 0 : index
      %c0_38 = arith.constant 0 : index
      %44 = vector.load %arg11[%43, %c0_37, %c0_38] : memref<8x2x32xf32, #tpu.memory_space<vmem>>, vector<1x2x32xf32>
      %45 = vector.shape_cast %44 : vector<1x2x32xf32> to vector<2x32xf32>
      %46 = vector.shape_cast %42 : vector<2x32xf32> to vector<1x2x32xf32>
      tpu.vector_store %arg11[%43, %c0_37, %c0_38], %46 {strides = array<i32>} : memref<8x2x32xf32, #tpu.memory_space<vmem>>, vector<1x2x32xf32>,
      scf.yield %42, %40 : vector<2x32xf32>, vector<2x32xf32>
    }
    %c8_i32_13 = arith.constant 8 : i32
    %c0_14 = arith.constant 0 : index
    %c0_15 = arith.constant 0 : index
    %c0_16 = arith.constant 0 : index
    %11 = vector.load %arg5[%c0_14, %c0_15, %c0_16] : memref<1x32x64xf32, #tpu.memory_space<vmem>>, vector<1x32x64xf32>
    %12 = vector.shape_cast %11 : vector<1x32x64xf32> to vector<32x64xf32>
    %c0_17 = arith.constant 0 : index
    %c0_18 = arith.constant 0 : index
    %c0_19 = arith.constant 0 : index
    %13 = vector.load %arg6[%c0_17, %c0_18, %c0_19] : memref<1x16x64xf32, #tpu.memory_space<vmem>>, vector<1x16x64xf32>
    %14 = vector.shape_cast %13 : vector<1x16x64xf32> to vector<16x64xf32>
    %c0_20 = arith.constant 0 : index
    %c0_21 = arith.constant 0 : index
    %c0_22 = arith.constant 0 : index
    %15 = vector.load %arg7[%c0_20, %c0_21, %c0_22] : memref<1x1x64xf32, #tpu.memory_space<vmem>>, vector<1x1x64xf32>
    %16 = vector.shape_cast %15 : vector<1x1x64xf32> to vector<1x64xf32>
    %c0_i32_23 = arith.constant 0 : i32
    %c8_i32_24 = arith.constant 8 : i32
    %17 = arith.addi %c0_i32_23, %c8_i32_24 : i32
    %c1_i32_25 = arith.constant 1 : i32
    scf.for %arg12 = %c0_i32_23 to %17 step %c1_i32_25  : i32 {
      %22 = arith.index_cast %arg12 : i32 to index
      %c0_33 = arith.constant 0 : index
      %c0_34 = arith.constant 0 : index
      %23 = vector.load %arg11[%22, %c0_33, %c0_34] : memref<8x2x32xf32, #tpu.memory_space<vmem>>, vector<1x2x32xf32>
      %24 = vector.shape_cast %23 : vector<1x2x32xf32> to vector<2x32xf32>
      %cst_35 = arith.constant dense<0.000000e+00> : vector<2x64xf32>
      %25 = tpu.matmul %24, %12, %cst_35 {dimension_numbers = #tpu.dot_dimension_numbers<[1], [0], [0], [1], [0, 0, 1, 1], [], []>} : vector<2x32xf32>, vector<32x64xf32>, vector<2x64xf32> -> vector<2x64xf32>
      %26 = vector.broadcast %16 : vector<1x64xf32> to vector<2x64xf32>
      %27 = arith.addf %25, %26 : vector<2x64xf32>
      %28 = arith.index_cast %arg12 : i32 to index
      %c0_36 = arith.constant 0 : index
      %c0_37 = arith.constant 0 : index
      %29 = vector.load %arg10[%28, %c0_36, %c0_37] : memref<8x2x64xf32, #tpu.memory_space<vmem>>, vector<1x2x64xf32>
      %30 = vector.shape_cast %29 : vector<1x2x64xf32> to vector<2x64xf32>
      %31 = vector.shape_cast %27 : vector<2x64xf32> to vector<1x2x64xf32>
      tpu.vector_store %arg10[%28, %c0_36, %c0_37], %31 {strides = array<i32>} : memref<8x2x64xf32, #tpu.memory_space<vmem>>, vector<1x2x64xf32>,
    }
    %c8_i32_26 = arith.constant 8 : i32
    %cst_27 = arith.constant 0.000000e+00 : f32
    %18 = vector.broadcast %cst_27 : f32 to vector<2x16xf32>
    %cst_28 = arith.constant 0.000000e+00 : f32
    %19 = vector.broadcast %cst_28 : f32 to vector<2x16xf32>
    %c0_i32_29 = arith.constant 0 : i32
    %c8_i32_30 = arith.constant 8 : i32
    %20 = arith.addi %c0_i32_29, %c8_i32_30 : i32
    %c1_i32_31 = arith.constant 1 : i32
    %21:2 = scf.for %arg12 = %c0_i32_29 to %20 step %c1_i32_31 iter_args(%arg13 = %18, %arg14 = %19) -> (vector<2x16xf32>, vector<2x16xf32>)  : i32 {
      %22 = arith.index_cast %arg12 : i32 to index
      %c0_33 = arith.constant 0 : index
      %c0_34 = arith.constant 0 : index
      %23 = vector.load %arg10[%22, %c0_33, %c0_34] : memref<8x2x64xf32, #tpu.memory_space<vmem>>, vector<1x2x64xf32>
      %24 = vector.shape_cast %23 : vector<1x2x64xf32> to vector<2x64xf32>
      %cst_35 = arith.constant dense<0.000000e+00> : vector<2x64xf32>
      %25 = tpu.matmul %arg13, %14, %cst_35 {dimension_numbers = #tpu.dot_dimension_numbers<[1], [0], [0], [1], [0, 0, 1, 1], [], []>} : vector<2x16xf32>, vector<16x64xf32>, vector<2x64xf32> -> vector<2x64xf32>
      %26 = arith.addf %24, %25 : vector<2x64xf32>
      %27 = vector.extract_strided_slice %26 {offsets = [0, 0], sizes = [2, 48], strides = [1, 1]} : vector<2x64xf32> to vector<2x48xf32>
      %28 = arith.negf %27 : vector<2x48xf32>
      %29 = math.exp %28 : vector<2x48xf32>
      %cst_36 = arith.constant 1.000000e+00 : f32
      %30 = vector.broadcast %cst_36 : f32 to vector<2x48xf32>
      %31 = arith.addf %30, %29 : vector<2x48xf32>
      %32 = arith.divf %30, %31 : vector<2x48xf32>
      %33 = vector.extract_strided_slice %32 {offsets = [0, 0], sizes = [2, 16], strides = [1, 1]} : vector<2x48xf32> to vector<2x16xf32>
      %34 = vector.extract_strided_slice %32 {offsets = [0, 16], sizes = [2, 16], strides = [1, 1]} : vector<2x48xf32> to vector<2x16xf32>
      %35 = vector.extract_strided_slice %32 {offsets = [0, 32], sizes = [2, 16], strides = [1, 1]} : vector<2x48xf32> to vector<2x16xf32>
      %36 = vector.extract_strided_slice %26 {offsets = [0, 48], sizes = [2, 16], strides = [1, 1]} : vector<2x64xf32> to vector<2x16xf32>
      %37 = math.tanh %36 : vector<2x16xf32>
      %38 = arith.mulf %34, %arg14 : vector<2x16xf32>
      %39 = arith.mulf %33, %37 : vector<2x16xf32>
      %40 = arith.addf %38, %39 : vector<2x16xf32>
      %41 = math.tanh %40 : vector<2x16xf32>
      %42 = arith.mulf %35, %41 : vector<2x16xf32>
      %c0_37 = arith.constant 0 : index
      %43 = arith.index_cast %arg12 : i32 to index
      %c0_38 = arith.constant 0 : index
      %c0_39 = arith.constant 0 : index
      %44 = vector.load %arg8[%c0_37, %43, %c0_38, %c0_39] : memref<1x8x2x16xf32, #tpu.memory_space<vmem>>, vector<1x1x2x16xf32>
      %45 = vector.shape_cast %44 : vector<1x1x2x16xf32> to vector<2x16xf32>
      %46 = vector.shape_cast %42 : vector<2x16xf32> to vector<1x1x2x16xf32>
      tpu.vector_store %arg8[%c0_37, %43, %c0_38, %c0_39], %46 {strides = array<i32>} : memref<1x8x2x16xf32, #tpu.memory_space<vmem>>, vector<1x1x2x16xf32>,
      scf.yield %42, %40 : vector<2x16xf32>, vector<2x16xf32>
    }
    %c8_i32_32 = arith.constant 8 : i32
    return
  }
  func.func @transform_0(%arg0: i32) -> (i32, i32, i32, i32) {
    %c0_i32 = arith.constant 0 : i32
    %c0_i32_0 = arith.constant 0 : i32
    %c0_i32_1 = arith.constant 0 : i32
    %c0_i32_2 = arith.constant 0 : i32
    return %arg0, %c0_i32, %c0_i32_0, %c0_i32_1 : i32, i32, i32, i32
  }
  func.func @transform_1(%arg0: i32) -> (i32, i32, i32) {
    %c0_i32 = arith.constant 0 : i32
    %c0_i32_0 = arith.constant 0 : i32
    %c0_i32_1 = arith.constant 0 : i32
    return %arg0, %c0_i32, %c0_i32_0 : i32, i32, i32
  }
  func.func @transform_2(%arg0: i32) -> (i32, i32, i32) {
    %c0_i32 = arith.constant 0 : i32
    %c0_i32_0 = arith.constant 0 : i32
    %c0_i32_1 = arith.constant 0 : i32
    return %arg0, %c0_i32, %c0_i32_0 : i32, i32, i32
  }
  func.func @transform_3(%arg0: i32) -> (i32, i32, i32) {
    %c0_i32 = arith.constant 0 : i32
    %c0_i32_0 = arith.constant 0 : i32
    %c0_i32_1 = arith.constant 0 : i32
    return %arg0, %c0_i32, %c0_i32_0 : i32, i32, i32
  }
  func.func @transform_4(%arg0: i32) -> (i32, i32, i32) {
    %c0_i32 = arith.constant 0 : i32
    %c0_i32_0 = arith.constant 0 : i32
    %c0_i32_1 = arith.constant 0 : i32
    return %arg0, %c0_i32, %c0_i32_0 : i32, i32, i32
  }
  func.func @transform_5(%arg0: i32) -> (i32, i32, i32) {
    %c0_i32 = arith.constant 0 : i32
    %c0_i32_0 = arith.constant 0 : i32
    %c0_i32_1 = arith.constant 0 : i32
    return %arg0, %c0_i32, %c0_i32_0 : i32, i32, i32
  }
  func.func @transform_6(%arg0: i32) -> (i32, i32, i32) {
    %c0_i32 = arith.constant 0 : i32
    %c0_i32_0 = arith.constant 0 : i32
    %c0_i32_1 = arith.constant 0 : i32
    return %arg0, %c0_i32, %c0_i32_0 : i32, i32, i32
  }
  func.func @transform_7(%arg0: i32) -> (i32, i32, i32, i32) {
    %c0_i32 = arith.constant 0 : i32
    %c0_i32_0 = arith.constant 0 : i32
    %c0_i32_1 = arith.constant 0 : i32
    %c0_i32_2 = arith.constant 0 : i32
    return %arg0, %c0_i32, %c0_i32_0, %c0_i32_1 : i32, i32, i32, i32
  }
}

</mosaic_0001>

<llo_original>
// kernel: deep_ptm_forward.7
$region0: #{deep_ptm_forward.7}
  #allocation0 [shape = 'u32[]', space=smem, size = 0x4, offset = 0x4, fixed_abs, tag = 'smem constant byte address 0x4 - core index']
  #allocation1 [shape = 'u32[72,128]{1,0:T(1,128)}', space=vmem, size = 0x9000, scoped, tag = 'internal scratch']
  #allocation2 [shape = 'f32[1,1]{1,0:T(1,128)S(1)}', space=vmem, size = 0x200, scoped, tag = 'scoped memory for deep_ptm_forward.7']
  %s0 = inlined_call_operand.vmem [shape: f32[16,16], index: 0, kind: input, shape index: {}]
  %s1 = inlined_call_operand.vmem [shape: f32[16,1], index: 1, kind: input, shape index: {}]
  %s2 = inlined_call_operand.<no memory space> [shape: f32[1,1], index: 2, kind: input, shape index: {}]
  %s3 = inlined_call_operand.vmem [shape: f32[16,1], index: 3, kind: output, shape index: {}]
  %s4 = sld [smem:[#allocation0]]
  $region22: #{deep_ptm_forward.7} parent=0
    _
  %s6 = ssub.s32 1, %s4
  %s7 = scalar_select 0, %s6, %s4
  %v8 = vstv %s2
  %9 = vst [vmem:[#allocation2] sm:$0x1] %v8
  // Predicated region
  $region2: #{deep_ptm_forward.7} parent=0 // pred_check
    _
  $region3: #{deep_ptm_forward.7} parent=0 // pred_check_branch
    %11 = sbr.rel (0) target = $region5
  $region4: #{deep_ptm_forward.7} parent=0 // pred_region
    _
  $region5: #{deep_ptm_forward.7} parent=0 // pred_fallthru
    _
  // Predicated region
  $region6: #{deep_ptm_forward.7} parent=0 // pred_check
    _
  $region7: #{deep_ptm_forward.7} parent=0 // pred_check_branch
    %13 = sbr.rel (0) target = $region9
  $region8: #{deep_ptm_forward.7} parent=0 // pred_region
    _
  $region9: #{deep_ptm_forward.7} parent=0 // pred_fallthru
    _
  // Predicated region
  $region10: #{deep_ptm_forward.7} parent=0 // pred_check
    _
  $region11: #{deep_ptm_forward.7} parent=0 // pred_check_branch
    %15 = sbr.rel (0) target = $region13
  $region12: #{deep_ptm_forward.7} parent=0 // pred_region
    _
  $region13: #{deep_ptm_forward.7} parent=0 // pred_fallthru
    _
  %v16 = vld [vmem:[%s0] sm:$0xff]
  %v17 = vld [vmem:[%s0 + $0x8] sm:$0xff]
  %v18 = vld [vmem:[%s1] sm:$0xff]
  %v19 = vld [vmem:[%s1 + $0x8] sm:$0xff]
  %v20 = vld [vmem:[#allocation2] sm:$0x1]
  %v22 = vperm.slane %v20, 0
  %vm24 = vcmask 130048
  %v26 = vsel %vm24, %v16, 0
  %v29 = vsel %vm24, %v17, 0
  %31 = vmatpush.msra.mxu0 0.0
  %32 = vmatpush.msra.mxu0 0.0
  %33 = vmatpush.msra.mxu0 0.0
  %34 = vmatpush.msra.mxu0 0.0
  %35 = vmatpush.msra.mxu0 0.0
  %36 = vmatpush.msra.mxu0 0.0
  %37 = vmatpush.msra.mxu0 0.0
  %38 = vmatpush.msra.mxu0 0.0
  %39 = vmatpush.msra.mxu0 0.0
  %40 = vmatpush.msra.mxu0 0.0
  %41 = vmatpush.msra.mxu0 0.0
  %42 = vmatpush.msra.mxu0 0.0
  %43 = vmatpush.msra.mxu0 0.0
  %44 = vmatpush.msra.mxu0 0.0
  %45 = vmatpush.msra.mxu0 %v19
  %46 = vmatpush.msra.mxu0 %v18
  %47 = vmatmul.f32.gmra.mxu0 %v26
  %v48 = vpop.f32.mrf.mxu0
  %v49 = vadd.f32 %v22, %v48
  %50 = vmatmul.f32.gmra.mxu0 %v29
  %v51 = vpop.f32.mrf.mxu0
  %v52 = vadd.f32 %v22, %v51
  %53 = vdwg.mxu0
  %vm54 = vcmask 7168
  %55 = vst.msk [vmem:[%s3] sm:$0xff] %vm54, %v49
  %56 = vst.msk [vmem:[%s3 + $0x8] sm:$0xff] %vm54, %v52
  // Predicated region
  $region14: #{deep_ptm_forward.7} parent=0 // pred_check
    _
  $region15: #{deep_ptm_forward.7} parent=0 // pred_check_branch
    %58 = sbr.rel (0) target = $region17
  $region16: #{deep_ptm_forward.7} parent=0 // pred_region
    _
  $region17: #{deep_ptm_forward.7} parent=0 // pred_fallthru
    _
  // Predicated region
  $region18: #{deep_ptm_forward.7} parent=0 // pred_check
    _
  $region19: #{deep_ptm_forward.7} parent=0 // pred_check_branch
    %60 = sbr.rel (0) target = $region21
  $region20: #{deep_ptm_forward.7} parent=0 // pred_region
    _
  $region21: #{deep_ptm_forward.7} parent=0 // pred_fallthru
    _

// kernel: deep_ptm_forward.5
$region0: #{deep_ptm_forward.5}
  #allocation0 [shape = 'u32[]', space=smem, size = 0x4, offset = 0x4, fixed_abs, tag = 'smem constant byte address 0x4 - core index']
  #allocation1 [shape = 'u32[72,128]{1,0:T(1,128)}', space=vmem, size = 0x9000, scoped, tag = 'internal scratch']
  %s0 = inlined_call_operand.vmem [shape: f32[2,8,16], index: 0, kind: input, shape index: {}]
  %s1 = inlined_call_operand.vmem [shape: f32[16,48], index: 1, kind: input, shape index: {}]
  %s2 = inlined_call_operand.vmem [shape: f32[1,48], index: 2, kind: input, shape index: {}]
  %s3 = inlined_call_operand.vmem [shape: f32[16,16], index: 3, kind: input, shape index: {}]
  %s4 = inlined_call_operand.vmem [shape: f32[1,16], index: 4, kind: input, shape index: {}]
  %s5 = inlined_call_operand.vmem [shape: f32[16,8], index: 5, kind: input, shape index: {}]
  %s6 = inlined_call_operand.vmem [shape: f32[1,8], index: 6, kind: input, shape index: {}]
  %s7 = inlined_call_operand.vmem [shape: f32[2,8,8], index: 7, kind: output, shape index: {}]
  %s8 = sld [smem:[#allocation0]]
  $region45: #{deep_ptm_forward.5} parent=0
    _
  %s10 = ssub.s32 1, %s8
  %s11 = scalar_select 0, %s10, %s8
  // Predicated region
  $region2: #{deep_ptm_forward.5} parent=0 // pred_check
    _
  $region3: #{deep_ptm_forward.5} parent=0 // pred_check_branch
    %13 = sbr.rel (0) target = $region5
  $region4: #{deep_ptm_forward.5} parent=0 // pred_region
    _
  $region5: #{deep_ptm_forward.5} parent=0 // pred_fallthru
    _
  // Predicated region
  $region6: #{deep_ptm_forward.5} parent=0 // pred_check
    _
  $region7: #{deep_ptm_forward.5} parent=0 // pred_check_branch
    %15 = sbr.rel (0) target = $region9
  $region8: #{deep_ptm_forward.5} parent=0 // pred_region
    _
  $region9: #{deep_ptm_forward.5} parent=0 // pred_fallthru
    _
  // Predicated region
  $region10: #{deep_ptm_forward.5} parent=0 // pred_check
    _
  $region11: #{deep_ptm_forward.5} parent=0 // pred_check_branch
    %17 = sbr.rel (0) target = $region13
  $region12: #{deep_ptm_forward.5} parent=0 // pred_region
    _
  $region13: #{deep_ptm_forward.5} parent=0 // pred_fallthru
    _
  // Predicated region
  $region14: #{deep_ptm_forward.5} parent=0 // pred_check
    _
  $region15: #{deep_ptm_forward.5} parent=0 // pred_check_branch
    %19 = sbr.rel (0) target = $region17
  $region16: #{deep_ptm_forward.5} parent=0 // pred_region
    _
  $region17: #{deep_ptm_forward.5} parent=0 // pred_fallthru
    _
  // Predicated region
  $region18: #{deep_ptm_forward.5} parent=0 // pred_check
    _
  $region19: #{deep_ptm_forward.5} parent=0 // pred_check_branch
    %21 = sbr.rel (0) target = $region21
  $region20: #{deep_ptm_forward.5} parent=0 // pred_region
    _
  $region21: #{deep_ptm_forward.5} parent=0 // pred_fallthru
    _
  // Predicated region
  $region22: #{deep_ptm_forward.5} parent=0 // pred_check
    _
  $region23: #{deep_ptm_forward.5} parent=0 // pred_check_branch
    %23 = sbr.rel (0) target = $region25
  $region24: #{deep_ptm_forward.5} parent=0 // pred_region
    _
  $region25: #{deep_ptm_forward.5} parent=0 // pred_fallthru
    _
  // Predicated region
  $region26: #{deep_ptm_forward.5} parent=0 // pred_check
    _
  $region27: #{deep_ptm_forward.5} parent=0 // pred_check_branch
    %25 = sbr.rel (0) target = $region29
  $region28: #{deep_ptm_forward.5} parent=0 // pred_region
    _
  $region29: #{deep_ptm_forward.5} parent=0 // pred_fallthru
    _
  %v26 = vld [vmem:[%s1] sm:$0xff]
  %v27 = vld [vmem:[%s1 + $0x8] sm:$0xff]
  %v28 = vld [vmem:[%s2] sm:$0x1]
  %v29 = vld [vmem:[%s3] sm:$0xff]
  %v30 = vld [vmem:[%s3 + $0x8] sm:$0xff]
  %v31 = vld [vmem:[%s4] sm:$0x1]
  %v32 = vld [vmem:[%s5] sm:$0xff]
  %v33 = vld [vmem:[%s5 + $0x8] sm:$0xff]
  %v34 = vld [vmem:[%s6] sm:$0x1]
  loop: start=0, step=1, limit=2
  $region30: #{deep_ptm_forward.5} parent=0 // loop_pre_header
    _
  $region31: #{deep_ptm_forward.5} parent=0 // loop_header
    %s36 = sphi 0, %s40
    %p37 = scmp.ge.s32.totalorder %s36, 2
  $region32: #{deep_ptm_forward.5} parent=0 // loop_header_branch
    %39 = sbr.rel (%p37) target = $region36
  $region33: #{deep_ptm_forward.5} parent=0 // loop_body
    %s41 = smul.u32 %s36, 8
    %s42 = scalar_lea.vmem %s0, %s41
    %v43 = vld [vmem:[%s42] sm:$0xff]
    %v45 = vperm.slane %v28, 0
    %vm47 = vcmask 130048
    %v49 = vsel %vm47, %v43, 0
    %51 = vmatpush.msra.mxu0 0.0
    %52 = vmatpush.msra.mxu0 0.0
    %53 = vmatpush.msra.mxu0 0.0
    %54 = vmatpush.msra.mxu0 0.0
    %55 = vmatpush.msra.mxu0 0.0
    %56 = vmatpush.msra.mxu0 0.0
    %57 = vmatpush.msra.mxu0 0.0
    %58 = vmatpush.msra.mxu0 0.0
    %59 = vmatpush.msra.mxu0 0.0
    %60 = vmatpush.msra.mxu0 0.0
    %61 = vmatpush.msra.mxu0 0.0
    %62 = vmatpush.msra.mxu0 0.0
    %63 = vmatpush.msra.mxu0 0.0
    %64 = vmatpush.msra.mxu0 0.0
    %65 = vmatpush.msra.mxu0 %v27
    %66 = vmatpush.msra.mxu0 %v26
    %67 = vmatmul.f32.gmra.mxu0 %v49
    %v68 = vpop.f32.mrf.mxu0
    %v69 = vadd.f32 %v45, %v68
    %70 = vdwg.mxu0
    %v71 = vmul.f32 %v69, 0.35355338
    %73 = vrot.lane.b32.xlu0 %v69, 112
    %v74 = vpop.permute.xlu0 %73
    %vm75 = vcmask 64512
    %v77 = vsel %vm75, %v71, 0
    %v79 = vsel %vm75, %v74, 0
    %81 = vmatpush.xpose.msra.mxu0 0.0
    %82 = vmatpush.xpose.msra.mxu0 0.0
    %83 = vmatpush.xpose.msra.mxu0 0.0
    %84 = vmatpush.xpose.msra.mxu0 0.0
    %85 = vmatpush.xpose.msra.mxu0 0.0
    %86 = vmatpush.xpose.msra.mxu0 0.0
    %87 = vmatpush.xpose.msra.mxu0 0.0
    %88 = vmatpush.xpose.msra.mxu0 0.0
    %89 = vmatpush.xpose.msra.mxu0 0.0
    %90 = vmatpush.xpose.msra.mxu0 0.0
    %91 = vmatpush.xpose.msra.mxu0 0.0
    %92 = vmatpush.xpose.msra.mxu0 0.0
    %93 = vmatpush.xpose.msra.mxu0 0.0
    %94 = vmatpush.xpose.msra.mxu0 0.0
    %95 = vmatpush.xpose.msra.mxu0 0.0
    %96 = vmatpush.xpose.msra.mxu0 %v79
    %97 = vmatmul.f32.gmra.mxu0 %v77
    %v98 = vpop.f32.mrf.mxu0
    %v99 = vadd.f32 0.0, %v98
    %100 = vdwg.mxu0
    %v101 = vsel %vm75, %v99, -inf
    %102 = vmax.xlane.f32.xlu0 %v101
    %v103 = vpop.xlane.xlu0 %102
    %v104 = vsub.f32 %v99, %v103
    %v105 = vmul.f32 %v104, 1.442695
    %v106 = vpow.pop %v105
    %v107 = vsel %vm75, %v106, 0.0
    %108 = vadd.xlane.f32.xlu0 %v107
    %v109 = vpop.xlane.xlu0 %108
    %v110 = vrcp.pop %v109
    %111 = vrot.lane.b32.xlu0 %v69, 96
    %v112 = vpop.permute.xlu0 %111
    %v115 = vsel %vm75, %v106, 0
    %117 = vmatpush.msra.mxu0 0.0
    %118 = vmatpush.msra.mxu0 0.0
    %119 = vmatpush.msra.mxu0 0.0
    %120 = vmatpush.msra.mxu0 0.0
    %121 = vmatpush.msra.mxu0 0.0
    %122 = vmatpush.msra.mxu0 0.0
    %123 = vmatpush.msra.mxu0 0.0
    %124 = vmatpush.msra.mxu0 0.0
    %125 = vmatpush.msra.mxu0 0.0
    %126 = vmatpush.msra.mxu0 0.0
    %127 = vmatpush.msra.mxu0 0.0
    %128 = vmatpush.msra.mxu0 0.0
    %129 = vmatpush.msra.mxu0 0.0
    %130 = vmatpush.msra.mxu0 0.0
    %131 = vmatpush.msra.mxu0 0.0
    %132 = vmatpush.msra.mxu0 %v112
    %133 = vmatmul.f32.gmra.mxu0 %v115
    %v134 = vpop.f32.mrf.mxu0
    %v135 = vadd.f32 0.0, %v134
    %136 = vdwg.mxu0
    %v137 = vmul.f32 %v135, %v110
    %138 = vrot.lane.b32.xlu0 %v71, 120
    %v139 = vpop.permute.xlu0 %138
    %140 = vrot.lane.b32.xlu0 %v69, 104
    %v141 = vpop.permute.xlu0 %140
    %v142 = vsel %vm75, %v139, 0
    %v144 = vsel %vm75, %v141, 0
    %146 = vmatpush.xpose.msra.mxu0 0.0
    %147 = vmatpush.xpose.msra.mxu0 0.0
    %148 = vmatpush.xpose.msra.mxu0 0.0
    %149 = vmatpush.xpose.msra.mxu0 0.0
    %150 = vmatpush.xpose.msra.mxu0 0.0
    %151 = vmatpush.xpose.msra.mxu0 0.0
    %152 = vmatpush.xpose.msra.mxu0 0.0
    %153 = vmatpush.xpose.msra.mxu0 0.0
    %154 = vmatpush.xpose.msra.mxu0 0.0
    %155 = vmatpush.xpose.msra.mxu0 0.0
    %156 = vmatpush.xpose.msra.mxu0 0.0
    %157 = vmatpush.xpose.msra.mxu0 0.0
    %158 = vmatpush.xpose.msra.mxu0 0.0
    %159 = vmatpush.xpose.msra.mxu0 0.0
    %160 = vmatpush.xpose.msra.mxu0 0.0
    %161 = vmatpush.xpose.msra.mxu0 %v144
    %162 = vmatmul.f32.gmra.mxu0 %v142
    %v163 = vpop.f32.mrf.mxu0
    %v164 = vadd.f32 0.0, %v163
    %165 = vdwg.mxu0
    %v166 = vsel %vm75, %v164, -inf
    %167 = vmax.xlane.f32.xlu0 %v166
    %v168 = vpop.xlane.xlu0 %167
    %v169 = vsub.f32 %v164, %v168
    %v170 = vmul.f32 %v169, 1.442695
    %v171 = vpow.pop %v170
    %v172 = vsel %vm75, %v171, 0.0
    %173 = vadd.xlane.f32.xlu0 %v172
    %v174 = vpop.xlane.xlu0 %173
    %v175 = vrcp.pop %v174
    %176 = vrot.lane.b32.xlu0 %v69, 88
    %v177 = vpop.permute.xlu0 %176
    %v180 = vsel %vm75, %v171, 0
    %182 = vmatpush.msra.mxu0 0.0
    %183 = vmatpush.msra.mxu0 0.0
    %184 = vmatpush.msra.mxu0 0.0
    %185 = vmatpush.msra.mxu0 0.0
    %186 = vmatpush.msra.mxu0 0.0
    %187 = vmatpush.msra.mxu0 0.0
    %188 = vmatpush.msra.mxu0 0.0
    %189 = vmatpush.msra.mxu0 0.0
    %190 = vmatpush.msra.mxu0 0.0
    %191 = vmatpush.msra.mxu0 0.0
    %192 = vmatpush.msra.mxu0 0.0
    %193 = vmatpush.msra.mxu0 0.0
    %194 = vmatpush.msra.mxu0 0.0
    %195 = vmatpush.msra.mxu0 0.0
    %196 = vmatpush.msra.mxu0 0.0
    %197 = vmatpush.msra.mxu0 %v177
    %198 = vmatmul.f32.gmra.mxu0 %v180
    %v199 = vpop.f32.mrf.mxu0
    %v200 = vadd.f32 0.0, %v199
    %201 = vdwg.mxu0
    %v202 = vmul.f32 %v200, %v175
    %v204 = vsel %vm75, %v202, 0
    %206 = vmatpush.msra.mxu0 0.0
    %207 = vmatpush.msra.mxu0 0.0
    %208 = vmatpush.msra.mxu0 0.0
    %209 = vmatpush.msra.mxu0 0.0
    %210 = vmatpush.msra.mxu0 0.0
    %211 = vmatpush.msra.mxu0 0.0
    %212 = vmatpush.msra.mxu0 0.0
    %213 = vmatpush.msra.mxu0 0.0
    %214 = vmatpush.msra.mxu0 0.0
    %215 = vmatpush.msra.mxu0 0.0
    %216 = vmatpush.msra.mxu0 0.0
    %217 = vmatpush.msra.mxu0 0.0
    %218 = vmatpush.msra.mxu0 0.0
    %219 = vmatpush.msra.mxu0 0.0
    %220 = vmatpush.msra.mxu0 0.0
    %221 = vmatpush.msra.mxu0 %v30
    %222 = vmatmul.f32.gmra.mxu0 %v204
    %v223 = vpop.f32.mrf.mxu0
    %v224 = vadd.f32 0.0, %v223
    %225 = vdwg.mxu0
    %v227 = vsel %vm75, %v137, 0
    %229 = vmatpush.msra.mxu0 0.0
    %230 = vmatpush.msra.mxu0 0.0
    %231 = vmatpush.msra.mxu0 0.0
    %232 = vmatpush.msra.mxu0 0.0
    %233 = vmatpush.msra.mxu0 0.0
    %234 = vmatpush.msra.mxu0 0.0
    %235 = vmatpush.msra.mxu0 0.0
    %236 = vmatpush.msra.mxu0 0.0
    %237 = vmatpush.msra.mxu0 0.0
    %238 = vmatpush.msra.mxu0 0.0
    %239 = vmatpush.msra.mxu0 0.0
    %240 = vmatpush.msra.mxu0 0.0
    %241 = vmatpush.msra.mxu0 0.0
    %242 = vmatpush.msra.mxu0 0.0
    %243 = vmatpush.msra.mxu0 0.0
    %244 = vmatpush.msra.mxu0 %v29
    %245 = vmatmul.f32.gmra.mxu0 %v227
    %v246 = vpop.f32.mrf.mxu0
    %v247 = vadd.f32 %v224, %v246
    %248 = vdwg.mxu0
    %v250 = vperm.slane %v31, 0
    %v252 = vadd.f32 %v247, %v250
    %v254 = vperm.slane %v34, 0
    %v257 = vsel %vm47, %v252, 0
    %259 = vmatpush.msra.mxu0 0.0
    %260 = vmatpush.msra.mxu0 0.0
    %261 = vmatpush.msra.mxu0 0.0
    %262 = vmatpush.msra.mxu0 0.0
    %263 = vmatpush.msra.mxu0 0.0
    %264 = vmatpush.msra.mxu0 0.0
    %265 = vmatpush.msra.mxu0 0.0
    %266 = vmatpush.msra.mxu0 0.0
    %267 = vmatpush.msra.mxu0 0.0
    %268 = vmatpush.msra.mxu0 0.0
    %269 = vmatpush.msra.mxu0 0.0
    %270 = vmatpush.msra.mxu0 0.0
    %271 = vmatpush.msra.mxu0 0.0
    %272 = vmatpush.msra.mxu0 0.0
    %273 = vmatpush.msra.mxu0 %v33
    %274 = vmatpush.msra.mxu0 %v32
    %275 = vmatmul.f32.gmra.mxu0 %v257
    %v276 = vpop.f32.mrf.mxu0
    %v277 = vadd.f32 %v254, %v276
    %278 = vdwg.mxu0
    %s279 = scalar_lea.vmem %s7, %s41
    %280 = vst.msk [vmem:[%s279] sm:$0xff] %vm75, %v277
  $region34: #{deep_ptm_forward.5} parent=0 // loop_footer
    %s40 = sadd.s32 1, %s36
  $region35: #{deep_ptm_forward.5} parent=0 // loop_footer_branch
    %35 = sbr.rel target = $region31
  $region36: #{deep_ptm_forward.5} parent=0 // loop_exit
    _
  // Predicated region
  $region37: #{deep_ptm_forward.5} parent=0 // pred_check
    _
  $region38: #{deep_ptm_forward.5} parent=0 // pred_check_branch
    %282 = sbr.rel (0) target = $region40
  $region39: #{deep_ptm_forward.5} parent=0 // pred_region
    _
  $region40: #{deep_ptm_forward.5} parent=0 // pred_fallthru
    _
  // Predicated region
  $region41: #{deep_ptm_forward.5} parent=0 // pred_check
    _
  $region42: #{deep_ptm_forward.5} parent=0 // pred_check_branch
    %284 = sbr.rel (0) target = $region44
  $region43: #{deep_ptm_forward.5} parent=0 // pred_region
    _
  $region44: #{deep_ptm_forward.5} parent=0 // pred_fallthru
    _

// kernel: deep_ptm_forward.4
$region0: #{deep_ptm_forward.4}
  #allocation0 [shape = 'u32[]', space=smem, size = 0x4, offset = 0x4, fixed_abs, tag = 'smem constant byte address 0x4 - core index']
  #allocation1 [shape = 'u32[72,128]{1,0:T(1,128)}', space=vmem, size = 0x9000, scoped, tag = 'internal scratch']
  #allocation2 [shape = 'f32[8,2,128]{2,1,0:T(2,128)}', space=vmem, size = 0x2000, scoped, tag = 'scratch operand']
  #allocation3 [shape = 'f32[8,2,64]{2,1,0:T(2,128)}', space=vmem, size = 0x2000, scoped, tag = 'scratch operand']
  #allocation4 [shape = 'f32[8,2,32]{2,1,0:T(2,128)}', space=vmem, size = 0x2000, scoped, tag = 'scratch operand']
  %s0 = inlined_call_operand.vmem [shape: f32[2,8,2,4], index: 0, kind: input, shape index: {}]
  %s1 = inlined_call_operand.vmem [shape: f32[2,4,128], index: 1, kind: input, shape index: {}]
  %s2 = inlined_call_operand.vmem [shape: f32[2,32,128], index: 2, kind: input, shape index: {}]
  %s3 = inlined_call_operand.vmem [shape: f32[2,1,128], index: 3, kind: input, shape index: {}]
  %s4 = inlined_call_operand.vmem [shape: f32[2,32,64], index: 4, kind: input, shape index: {}]
  %s5 = inlined_call_operand.vmem [shape: f32[2,16,64], index: 5, kind: input, shape index: {}]
  %s6 = inlined_call_operand.vmem [shape: f32[2,1,64], index: 6, kind: input, shape index: {}]
  %s7 = inlined_call_operand.vmem [shape: f32[2,8,2,16], index: 7, kind: output, shape index: {}]
  %s8 = sld [smem:[#allocation0]]
  $region89: #{deep_ptm_forward.4} parent=0
    _
  %s10 = ssub.s32 1, %s8
  %s11 = scalar_select 0, %s10, %s8
  loop: start=0, step=1, limit=4
  $region2: #{deep_ptm_forward.4} parent=0 // loop_pre_header
    _
  $region3: #{deep_ptm_forward.4} parent=0 // loop_header
    %s13 = sphi 0, %s17
    %p14 = scmp.ge.s32.totalorder %s13, 4
    %s23 = sphi 0, %s25
    %s26 = sphi 0, %s23
    %s27 = sphi 0, %s26
    %s43 = sphi 0, %s27
    %s49 = sphi 0, %s51
    %s52 = sphi 0, %s49
    %s53 = sphi 0, %s52
    %s69 = sphi 0, %s53
    %s75 = sphi 0, %s77
    %s78 = sphi 0, %s75
    %s79 = sphi 0, %s78
    %s95 = sphi 0, %s79
    %s101 = sphi 0, %s103
    %s104 = sphi 0, %s101
    %s105 = sphi 0, %s104
    %s121 = sphi 0, %s105
    %s127 = sphi 0, %s129
    %s130 = sphi 0, %s127
    %s131 = sphi 0, %s130
    %s147 = sphi 0, %s131
    %s153 = sphi 0, %s155
    %s156 = sphi 0, %s153
    %s157 = sphi 0, %s156
    %s173 = sphi 0, %s157
    %s179 = sphi 0, %s181
    %s182 = sphi 0, %s179
    %s183 = sphi 0, %s182
    %s199 = sphi 0, %s183
    %s205 = sphi 0, %s207
    %s208 = sphi 0, %s205
    %s209 = sphi 0, %s208
    %s225 = sphi 0, %s209
  $region4: #{deep_ptm_forward.4} parent=0 // loop_header_branch
    %16 = sbr.rel (%p14) target = $region8
  $region5: #{deep_ptm_forward.4} parent=0 // loop_body
    %s18 = ssub.s32 %s13, 1
    %s19 = ssub.s32 %s13, 2
    %s20 = sadd.s32 %s13, 1
    %s21 = ssub.s32 %s13, %s20
    %p22 = scmp.eq.s32.totalorder %s21, 0
    %s24 = sadd.s32 %s23, 1
    %s25 = scalar_select %p22, %s23, %s24
    %p28 = pneg %p22
    %p29 = scmp.eq.s32.totalorder %s13, 1
    %p30 = por %p28, %p29
    %p31 = scmp.ne.s32.totalorder %s23, %s26
    %p32 = scmp.eq.s32.totalorder %s13, 0
    %p33 = por %p31, %p32
    %p34 = scmp.ne.s32.totalorder %s23, %s26
    %p35 = scmp.eq.s32.totalorder %s18, 1
    %p36 = por %p34, %p35
    %p37 = scmp.ne.s32.totalorder %s26, %s27
    %p38 = scmp.eq.s32.totalorder %s18, 0
    %p39 = por %p37, %p38
    %p40 = scmp.ne.s32.totalorder %s26, %s27
    %p41 = scmp.eq.s32.totalorder %s19, 1
    %p42 = por %p40, %p41
    %p44 = scmp.ne.s32.totalorder %s27, %s43
    %p45 = scmp.eq.s32.totalorder %s19, 0
    %p46 = por %p44, %p45
    %s47 = ssub.s32 %s13, %s20
    %p48 = scmp.eq.s32.totalorder %s47, 0
    %s50 = sadd.s32 %s49, 1
    %s51 = scalar_select %p48, %s49, %s50
    %p54 = pneg %p48
    %p55 = scmp.eq.s32.totalorder %s13, 1
    %p56 = por %p54, %p55
    %p57 = scmp.ne.s32.totalorder %s49, %s52
    %p58 = scmp.eq.s32.totalorder %s13, 0
    %p59 = por %p57, %p58
    %p60 = scmp.ne.s32.totalorder %s49, %s52
    %p61 = scmp.eq.s32.totalorder %s18, 1
    %p62 = por %p60, %p61
    %p63 = scmp.ne.s32.totalorder %s52, %s53
    %p64 = scmp.eq.s32.totalorder %s18, 0
    %p65 = por %p63, %p64
    %p66 = scmp.ne.s32.totalorder %s52, %s53
    %p67 = scmp.eq.s32.totalorder %s19, 1
    %p68 = por %p66, %p67
    %p70 = scmp.ne.s32.totalorder %s53, %s69
    %p71 = scmp.eq.s32.totalorder %s19, 0
    %p72 = por %p70, %p71
    %s73 = ssub.s32 %s13, %s20
    %p74 = scmp.eq.s32.totalorder %s73, 0
    %s76 = sadd.s32 %s75, 1
    %s77 = scalar_select %p74, %s75, %s76
    %p80 = pneg %p74
    %p81 = scmp.eq.s32.totalorder %s13, 1
    %p82 = por %p80, %p81
    %p83 = scmp.ne.s32.totalorder %s75, %s78
    %p84 = scmp.eq.s32.totalorder %s13, 0
    %p85 = por %p83, %p84
    %p86 = scmp.ne.s32.totalorder %s75, %s78
    %p87 = scmp.eq.s32.totalorder %s18, 1
    %p88 = por %p86, %p87
    %p89 = scmp.ne.s32.totalorder %s78, %s79
    %p90 = scmp.eq.s32.totalorder %s18, 0
    %p91 = por %p89, %p90
    %p92 = scmp.ne.s32.totalorder %s78, %s79
    %p93 = scmp.eq.s32.totalorder %s19, 1
    %p94 = por %p92, %p93
    %p96 = scmp.ne.s32.totalorder %s79, %s95
    %p97 = scmp.eq.s32.totalorder %s19, 0
    %p98 = por %p96, %p97
    %s99 = ssub.s32 %s13, %s20
    %p100 = scmp.eq.s32.totalorder %s99, 0
    %s102 = sadd.s32 %s101, 1
    %s103 = scalar_select %p100, %s101, %s102
    %p106 = pneg %p100
    %p107 = scmp.eq.s32.totalorder %s13, 1
    %p108 = por %p106, %p107
    %p109 = scmp.ne.s32.totalorder %s101, %s104
    %p110 = scmp.eq.s32.totalorder %s13, 0
    %p111 = por %p109, %p110
    %p112 = scmp.ne.s32.totalorder %s101, %s104
    %p113 = scmp.eq.s32.totalorder %s18, 1
    %p114 = por %p112, %p113
    %p115 = scmp.ne.s32.totalorder %s104, %s105
    %p116 = scmp.eq.s32.totalorder %s18, 0
    %p117 = por %p115, %p116
    %p118 = scmp.ne.s32.totalorder %s104, %s105
    %p119 = scmp.eq.s32.totalorder %s19, 1
    %p120 = por %p118, %p119
    %p122 = scmp.ne.s32.totalorder %s105, %s121
    %p123 = scmp.eq.s32.totalorder %s19, 0
    %p124 = por %p122, %p123
    %s125 = ssub.s32 %s13, %s20
    %p126 = scmp.eq.s32.totalorder %s125, 0
    %s128 = sadd.s32 %s127, 1
    %s129 = scalar_select %p126, %s127, %s128
    %p132 = pneg %p126
    %p133 = scmp.eq.s32.totalorder %s13, 1
    %p134 = por %p132, %p133
    %p135 = scmp.ne.s32.totalorder %s127, %s130
    %p136 = scmp.eq.s32.totalorder %s13, 0
    %p137 = por %p135, %p136
    %p138 = scmp.ne.s32.totalorder %s127, %s130
    %p139 = scmp.eq.s32.totalorder %s18, 1
    %p140 = por %p138, %p139
    %p141 = scmp.ne.s32.totalorder %s130, %s131
    %p142 = scmp.eq.s32.totalorder %s18, 0
    %p143 = por %p141, %p142
    %p144 = scmp.ne.s32.totalorder %s130, %s131
    %p145 = scmp.eq.s32.totalorder %s19, 1
    %p146 = por %p144, %p145
    %p148 = scmp.ne.s32.totalorder %s131, %s147
    %p149 = scmp.eq.s32.totalorder %s19, 0
    %p150 = por %p148, %p149
    %s151 = ssub.s32 %s13, %s20
    %p152 = scmp.eq.s32.totalorder %s151, 0
    %s154 = sadd.s32 %s153, 1
    %s155 = scalar_select %p152, %s153, %s154
    %p158 = pneg %p152
    %p159 = scmp.eq.s32.totalorder %s13, 1
    %p160 = por %p158, %p159
    %p161 = scmp.ne.s32.totalorder %s153, %s156
    %p162 = scmp.eq.s32.totalorder %s13, 0
    %p163 = por %p161, %p162
    %p164 = scmp.ne.s32.totalorder %s153, %s156
    %p165 = scmp.eq.s32.totalorder %s18, 1
    %p166 = por %p164, %p165
    %p167 = scmp.ne.s32.totalorder %s156, %s157
    %p168 = scmp.eq.s32.totalorder %s18, 0
    %p169 = por %p167, %p168
    %p170 = scmp.ne.s32.totalorder %s156, %s157
    %p171 = scmp.eq.s32.totalorder %s19, 1
    %p172 = por %p170, %p171
    %p174 = scmp.ne.s32.totalorder %s157, %s173
    %p175 = scmp.eq.s32.totalorder %s19, 0
    %p176 = por %p174, %p175
    %s177 = ssub.s32 %s13, %s20
    %p178 = scmp.eq.s32.totalorder %s177, 0
    %s180 = sadd.s32 %s179, 1
    %s181 = scalar_select %p178, %s179, %s180
    %p184 = pneg %p178
    %p185 = scmp.eq.s32.totalorder %s13, 1
    %p186 = por %p184, %p185
    %p187 = scmp.ne.s32.totalorder %s179, %s182
    %p188 = scmp.eq.s32.totalorder %s13, 0
    %p189 = por %p187, %p188
    %p190 = scmp.ne.s32.totalorder %s179, %s182
    %p191 = scmp.eq.s32.totalorder %s18, 1
    %p192 = por %p190, %p191
    %p193 = scmp.ne.s32.totalorder %s182, %s183
    %p194 = scmp.eq.s32.totalorder %s18, 0
    %p195 = por %p193, %p194
    %p196 = scmp.ne.s32.totalorder %s182, %s183
    %p197 = scmp.eq.s32.totalorder %s19, 1
    %p198 = por %p196, %p197
    %p200 = scmp.ne.s32.totalorder %s183, %s199
    %p201 = scmp.eq.s32.totalorder %s19, 0
    %p202 = por %p200, %p201
    %s203 = ssub.s32 %s13, %s20
    %p204 = scmp.eq.s32.totalorder %s203, 0
    %s206 = sadd.s32 %s205, 1
    %s207 = scalar_select %p204, %s205, %s206
    %p210 = pneg %p204
    %p211 = scmp.eq.s32.totalorder %s13, 1
    %p212 = por %p210, %p211
    %p213 = scmp.ne.s32.totalorder %s205, %s208
    %p214 = scmp.eq.s32.totalorder %s13, 0
    %p215 = por %p213, %p214
    %p216 = scmp.ne.s32.totalorder %s205, %s208
    %p217 = scmp.eq.s32.totalorder %s18, 1
    %p218 = por %p216, %p217
    %p219 = scmp.ne.s32.totalorder %s208, %s209
    %p220 = scmp.eq.s32.totalorder %s18, 0
    %p221 = por %p219, %p220
    %p222 = scmp.ne.s32.totalorder %s208, %s209
    %p223 = scmp.eq.s32.totalorder %s19, 1
    %p224 = por %p222, %p223
    %p226 = scmp.ne.s32.totalorder %s209, %s225
    %p227 = scmp.eq.s32.totalorder %s19, 0
    %p228 = por %p226, %p227
    %p229 = scmp.le.s32.totalorder 1, %s13
    %p230 = scmp.lt.s32.totalorder %s13, 3
    %p231 = pnand %p229, %p230
    %p232 = pneg %p231
    // Predicated region
    $region9: #{deep_ptm_forward.4} parent=5 // pred_check
      _
    $region10: #{deep_ptm_forward.4} parent=5 // pred_check_branch
      %234 = sbr.rel (%p231) target = $region12
    $region11: #{deep_ptm_forward.4} parent=5 // pred_region
      %s235 = ssub.s32 %s13, 1
    $region12: #{deep_ptm_forward.4} parent=5 // pred_fallthru
      _
    %p236 = scmp.lt.s32.totalorder %s13, 2
    // Predicated region
    $region13: #{deep_ptm_forward.4} parent=5 // pred_check
      %p237 = pneg %p236
    $region14: #{deep_ptm_forward.4} parent=5 // pred_check_branch
      %239 = sbr.rel (%p237) target = $region16
    $region15: #{deep_ptm_forward.4} parent=5 // pred_region
      // Predicated region
      $region17: #{deep_ptm_forward.4} parent=15 // pred_check
        %p240 = pneg %p33
      $region18: #{deep_ptm_forward.4} parent=15 // pred_check_branch
        %242 = sbr.rel (%p240) target = $region20
      $region19: #{deep_ptm_forward.4} parent=15 // pred_region
        %p243 = scmp.lt.s32.totalorder %s13, 1
        %s244 = scalar_select %p243, %s13, 1
        %s245 = smul.addr %s244, 8
        %s246 = smul.addr %s245, 2
        %s247 = scalar_lea.vmem %s0, %s246
      $region20: #{deep_ptm_forward.4} parent=15 // pred_fallthru
        _
      // Predicated region
      $region21: #{deep_ptm_forward.4} parent=15 // pred_check
        %p248 = pneg %p59
      $region22: #{deep_ptm_forward.4} parent=15 // pred_check_branch
        %250 = sbr.rel (%p248) target = $region24
      $region23: #{deep_ptm_forward.4} parent=15 // pred_region
        %p251 = scmp.lt.s32.totalorder %s13, 1
        %s252 = scalar_select %p251, %s13, 1
        %s253 = smul.addr %s252, 4
        %s254 = scalar_lea.vmem %s1, %s253
      $region24: #{deep_ptm_forward.4} parent=15 // pred_fallthru
        _
      // Predicated region
      $region25: #{deep_ptm_forward.4} parent=15 // pred_check
        %p255 = pneg %p85
      $region26: #{deep_ptm_forward.4} parent=15 // pred_check_branch
        %257 = sbr.rel (%p255) target = $region28
      $region27: #{deep_ptm_forward.4} parent=15 // pred_region
        %p258 = scmp.lt.s32.totalorder %s13, 1
        %s259 = scalar_select %p258, %s13, 1
        %s260 = smul.addr %s259, 4
        %s261 = smul.addr %s260, 8
        %s262 = scalar_lea.vmem %s2, %s261
      $region28: #{deep_ptm_forward.4} parent=15 // pred_fallthru
        _
      // Predicated region
      $region29: #{deep_ptm_forward.4} parent=15 // pred_check
        %p263 = pneg %p111
      $region30: #{deep_ptm_forward.4} parent=15 // pred_check_branch
        %265 = sbr.rel (%p263) target = $region32
      $region31: #{deep_ptm_forward.4} parent=15 // pred_region
        %p266 = scmp.lt.s32.totalorder %s13, 1
        %s267 = scalar_select %p266, %s13, 1
        %s268 = scalar_lea.vmem %s3, %s267
      $region32: #{deep_ptm_forward.4} parent=15 // pred_fallthru
        _
      // Predicated region
      $region33: #{deep_ptm_forward.4} parent=15 // pred_check
        %p269 = pneg %p137
      $region34: #{deep_ptm_forward.4} parent=15 // pred_check_branch
        %271 = sbr.rel (%p269) target = $region36
      $region35: #{deep_ptm_forward.4} parent=15 // pred_region
        %p272 = scmp.lt.s32.totalorder %s13, 1
        %s273 = scalar_select %p272, %s13, 1
        %s274 = smul.addr %s273, 4
        %s275 = smul.addr %s274, 8
        %s276 = scalar_lea.vmem %s4, %s275
      $region36: #{deep_ptm_forward.4} parent=15 // pred_fallthru
        _
      // Predicated region
      $region37: #{deep_ptm_forward.4} parent=15 // pred_check
        %p277 = pneg %p163
      $region38: #{deep_ptm_forward.4} parent=15 // pred_check_branch
        %279 = sbr.rel (%p277) target = $region40
      $region39: #{deep_ptm_forward.4} parent=15 // pred_region
        %p280 = scmp.lt.s32.totalorder %s13, 1
        %s281 = scalar_select %p280, %s13, 1
        %s282 = smul.addr %s281, 2
        %s283 = smul.addr %s282, 8
        %s284 = scalar_lea.vmem %s5, %s283
      $region40: #{deep_ptm_forward.4} parent=15 // pred_fallthru
        _
      // Predicated region
      $region41: #{deep_ptm_forward.4} parent=15 // pred_check
        %p285 = pneg %p189
      $region42: #{deep_ptm_forward.4} parent=15 // pred_check_branch
        %287 = sbr.rel (%p285) target = $region44
      $region43: #{deep_ptm_forward.4} parent=15 // pred_region
        %p288 = scmp.lt.s32.totalorder %s13, 1
        %s289 = scalar_select %p288, %s13, 1
        %s290 = scalar_lea.vmem %s6, %s289
      $region44: #{deep_ptm_forward.4} parent=15 // pred_fallthru
        _
    $region16: #{deep_ptm_forward.4} parent=5 // pred_fallthru
      _
    %p291 = scmp.le.s32.totalorder 1, %s13
    %p292 = scmp.lt.s32.totalorder %s13, 3
    %p293 = pnand %p291, %p292
    %p294 = pneg %p293
    // Predicated region
    $region45: #{deep_ptm_forward.4} parent=5 // pred_check
      _
    $region46: #{deep_ptm_forward.4} parent=5 // pred_check_branch
      %296 = sbr.rel (%p293) target = $region48
    $region47: #{deep_ptm_forward.4} parent=5 // pred_region
      %s297 = ssub.s32 %s13, 1
      %p298 = scmp.lt.s32.totalorder %s18, 1
      %s299 = scalar_select %p298, %s18, 1
      %s300 = smul.addr %s299, 8
      %s301 = smul.addr %s300, 2
      %s302 = scalar_lea.vmem %s0, %s301
      %p303 = pneg %p39
      %p304 = pneg %p36
      %p305 = scmp.lt.s32.totalorder %s18, 1
      %s306 = scalar_select %p305, %s18, 1
      %s307 = smul.addr %s306, 4
      %s308 = scalar_lea.vmem %s1, %s307
      %p309 = pneg %p65
      %p310 = pneg %p62
      %p311 = scmp.lt.s32.totalorder %s18, 1
      %s312 = scalar_select %p311, %s18, 1
      %s313 = smul.addr %s312, 4
      %s314 = smul.addr %s313, 8
      %s315 = scalar_lea.vmem %s2, %s314
      %p316 = pneg %p91
      %p317 = pneg %p88
      %p318 = scmp.lt.s32.totalorder %s18, 1
      %s319 = scalar_select %p318, %s18, 1
      %s320 = scalar_lea.vmem %s3, %s319
      %p321 = pneg %p117
      %p322 = pneg %p114
      %p323 = scmp.lt.s32.totalorder %s18, 1
      %s324 = scalar_select %p323, %s18, 1
      %s325 = smul.addr %s324, 4
      %s326 = smul.addr %s325, 8
      %s327 = scalar_lea.vmem %s4, %s326
      %p328 = pneg %p143
      %p329 = pneg %p140
      %p330 = scmp.lt.s32.totalorder %s18, 1
      %s331 = scalar_select %p330, %s18, 1
      %s332 = smul.addr %s331, 2
      %s333 = smul.addr %s332, 8
      %s334 = scalar_lea.vmem %s5, %s333
      %p335 = pneg %p169
      %p336 = pneg %p166
      %p337 = scmp.lt.s32.totalorder %s18, 1
      %s338 = scalar_select %p337, %s18, 1
      %s339 = scalar_lea.vmem %s6, %s338
      %p340 = pneg %p195
      %p341 = pneg %p192
      %p342 = pneg %p221
      %p343 = pneg %p218
      %p344 = scmp.lt.s32.totalorder %s18, 1
      %s345 = scalar_select %p344, %s18, 1
      %s346 = smul.addr %s345, 8
      %s347 = smul.addr %s346, 2
      %s348 = scalar_lea.vmem %s7, %s347
      %p349 = scmp.lt.s32.totalorder %s18, 1
      %s350 = scalar_select %p349, %s18, 1
      %s351 = smul.addr %s350, 8
      %s352 = smul.addr %s351, 2
      %s353 = scalar_lea.vmem %s0, %s352
      %p354 = scmp.lt.s32.totalorder %s18, 1
      %s355 = scalar_select %p354, %s18, 1
      %s356 = smul.addr %s355, 4
      %s357 = scalar_lea.vmem %s1, %s356
      %p358 = scmp.lt.s32.totalorder %s18, 1
      %s359 = scalar_select %p358, %s18, 1
      %s360 = smul.addr %s359, 4
      %s361 = smul.addr %s360, 8
      %s362 = scalar_lea.vmem %s2, %s361
      %p363 = scmp.lt.s32.totalorder %s18, 1
      %s364 = scalar_select %p363, %s18, 1
      %s365 = scalar_lea.vmem %s3, %s364
      %p366 = scmp.lt.s32.totalorder %s18, 1
      %s367 = scalar_select %p366, %s18, 1
      %s368 = smul.addr %s367, 4
      %s369 = smul.addr %s368, 8
      %s370 = scalar_lea.vmem %s4, %s369
      %p371 = scmp.lt.s32.totalorder %s18, 1
      %s372 = scalar_select %p371, %s18, 1
      %s373 = smul.addr %s372, 2
      %s374 = smul.addr %s373, 8
      %s375 = scalar_lea.vmem %s5, %s374
      %p376 = scmp.lt.s32.totalorder %s18, 1
      %s377 = scalar_select %p376, %s18, 1
      %s378 = scalar_lea.vmem %s6, %s377
      %p379 = scmp.lt.s32.totalorder %s18, 1
      %s380 = scalar_select %p379, %s18, 1
      %s381 = smul.addr %s380, 8
      %s382 = smul.addr %s381, 2
      %s383 = scalar_lea.vmem %s7, %s382
      %v384 = vld [vmem:[%s357] sm:$0xf]
      %v385 = vld [vmem:[%s362] sm:$0xff]
      %v386 = vld [vmem:[%s362 + $0x8] sm:$0xff]
      %v387 = vld [vmem:[%s362 + $0x10] sm:$0xff]
      %v388 = vld [vmem:[%s362 + $0x18] sm:$0xff]
      %v389 = vld [vmem:[%s365] sm:$0x1]
      loop: start=0, step=1, limit=8
      $region49: #{deep_ptm_forward.4} parent=47 // loop_pre_header
        _
      $region50: #{deep_ptm_forward.4} parent=47 // loop_header
        %s391 = sphi 0, %s395
        %p392 = scmp.ge.s32.totalorder %s391, 8
      $region51: #{deep_ptm_forward.4} parent=47 // loop_header_branch
        %394 = sbr.rel (%p392) target = $region55
      $region52: #{deep_ptm_forward.4} parent=47 // loop_body
        %s396 = smul.u32 %s391, 2
        %s397 = scalar_lea.vmem %s353, %s396
        %v398 = vld [vmem:[%s397] sm:$0x3]
        %v400 = vperm.slane %v389, 0
        %vm402 = vcmask 31744
        %v404 = vsel %vm402, %v398, 0
        %vm406 = vcmask 1043456
        %v408 = vsel %vm406, %v384, 0
        %410 = vmatpush.msra.mxu0 0.0
        %411 = vmatpush.msra.mxu0 0.0
        %412 = vmatpush.msra.mxu0 0.0
        %413 = vmatpush.msra.mxu0 0.0
        %414 = vmatpush.msra.mxu0 0.0
        %415 = vmatpush.msra.mxu0 0.0
        %416 = vmatpush.msra.mxu0 0.0
        %417 = vmatpush.msra.mxu0 0.0
        %418 = vmatpush.msra.mxu0 0.0
        %419 = vmatpush.msra.mxu0 0.0
        %420 = vmatpush.msra.mxu0 0.0
        %421 = vmatpush.msra.mxu0 0.0
        %422 = vmatpush.msra.mxu0 0.0
        %423 = vmatpush.msra.mxu0 0.0
        %424 = vmatpush.msra.mxu0 0.0
        %425 = vmatpush.msra.mxu0 %v408
        %426 = vmatmul.f32.gmra.mxu0 %v404
        %v427 = vpop.f32.mrf.mxu0
        %v428 = vadd.f32 %v400, %v427
        %429 = vdwg.mxu0
        %s430 = scalar_lea.vmem [#allocation2], %s396
        %431 = vst [vmem:[%s430] sm:$0x3] %v428
      $region53: #{deep_ptm_forward.4} parent=47 // loop_footer
        %s395 = sadd.s32 1, %s391
      $region54: #{deep_ptm_forward.4} parent=47 // loop_footer_branch
        %390 = sbr.rel target = $region50
      $region55: #{deep_ptm_forward.4} parent=47 // loop_exit
        _
      loop: start=0, step=1, limit=8
      $region56: #{deep_ptm_forward.4} parent=47 // loop_pre_header
        _
      $region57: #{deep_ptm_forward.4} parent=47 // loop_header
        %s433 = sphi 0, %s437
        %p434 = scmp.ge.s32.totalorder %s433, 8
        %v438 = vphi 0.0, %v506
        %v439 = vphi 0.0, %v500
      $region58: #{deep_ptm_forward.4} parent=47 // loop_header_branch
        %436 = sbr.rel (%p434) target = $region62
      $region59: #{deep_ptm_forward.4} parent=47 // loop_body
        %s440 = smul.u32 %s433, 2
        %s441 = scalar_lea.vmem [#allocation2], %s440
        %v442 = vld [vmem:[%s441] sm:$0x3]
        %444 = vrot.lane.b32.xlu0 %v438, 64
        %v445 = vpop.permute.xlu0 %444
        %vm446 = vcmask 261120
        %v447 = vsel %vm446, %v445, 0
        %449 = vmatpush.msra.mxu0 0.0
        %450 = vmatpush.msra.mxu0 0.0
        %451 = vmatpush.msra.mxu0 0.0
        %452 = vmatpush.msra.mxu0 0.0
        %453 = vmatpush.msra.mxu0 0.0
        %454 = vmatpush.msra.mxu0 0.0
        %455 = vmatpush.msra.mxu0 0.0
        %456 = vmatpush.msra.mxu0 0.0
        %457 = vmatpush.msra.mxu0 0.0
        %458 = vmatpush.msra.mxu0 0.0
        %459 = vmatpush.msra.mxu0 0.0
        %460 = vmatpush.msra.mxu0 0.0
        %461 = vmatpush.msra.mxu0 %v388
        %462 = vmatpush.msra.mxu0 %v387
        %463 = vmatpush.msra.mxu0 %v386
        %464 = vmatpush.msra.mxu0 %v385
        %465 = vmatmul.f32.gmra.mxu0 %v447
        %v466 = vpop.f32.mrf.mxu0
        %v467 = vadd.f32 0.0, %v466
        %468 = vdwg.mxu0
        %v469 = vadd.f32 %v442, %v467
        %v470 = vxor.u32 %v469, 2147483648
        %v471 = vmul.f32 %v470, 1.442695
        %v472 = vpow.pop %v471
        %v473 = vadd.f32 %v472, 1.0
        %v474 = vrcp.pop %v473
        %v475 = vmul.f32 %v473, %v474
        %v476 = vsub.f32 1.0, %v475
        %v477 = vmul.f32 %v474, %v476
        %v478 = vadd.f32 %v474, %v477
        %vm479 = vweird.f32 %v473
        %vm480 = vweird.f32 %v474
        %vm481 = vmor %vm479, %vm480
        %v482 = vsel %vm481, %v474, %v478
        %v483 = vand.u32 2147483647, %v473
        %vm484 = vcmp.eq.f32.partialorder %v483, 8.507059e+37
        %v485 = vand.u32 %v473, 2147483648
        %v486 = vor.u32 1.1754944e-38, %v485
        %v487 = vsel %vm484, %v486, %v482
        %v488 = vmul.f32 1.0, %v487
        %v489 = vtanh.pop %v469
        %v490 = vmul.f32 %v488, %v439
        %492 = vrot.lane.b32.xlu0 %v489, 32
        %v493 = vpop.permute.xlu0 %492
        %v495 = vmul.f32 %v488, %v493
        %497 = vrot.lane.b32.xlu0 %v495, 32
        %v498 = vpop.permute.xlu0 %497
        %v500 = vadd.f32 %v490, %v498
        %v501 = vtanh.pop %v500
        %503 = vrot.lane.b32.xlu0 %v501, 32
        %v504 = vpop.permute.xlu0 %503
        %v506 = vmul.f32 %v488, %v504
        %508 = vrot.lane.b32.xlu0 %v506, 64
        %v509 = vpop.permute.xlu0 %508
        %s511 = scalar_lea.vmem [#allocation4], %s440
        %vm512 = vcmask 254976
        %513 = vst.msk [vmem:[%s511] sm:$0x3] %vm512, %v509
      $region60: #{deep_ptm_forward.4} parent=47 // loop_footer
        %s437 = sadd.s32 1, %s433
      $region61: #{deep_ptm_forward.4} parent=47 // loop_footer_branch
        %432 = sbr.rel target = $region57
      $region62: #{deep_ptm_forward.4} parent=47 // loop_exit
        _
      %v514 = vld [vmem:[%s370] sm:$0xff]
      %v515 = vld [vmem:[%s370 + $0x8] sm:$0xff]
      %v516 = vld [vmem:[%s370 + $0x10] sm:$0xff]
      %v517 = vld [vmem:[%s370 + $0x18] sm:$0xff]
      %v518 = vld [vmem:[%s375] sm:$0xff]
      %v519 = vld [vmem:[%s375 + $0x8] sm:$0xff]
      %v520 = vld [vmem:[%s378] sm:$0x1]
      loop: start=0, step=1, limit=8
      $region63: #{deep_ptm_forward.4} parent=47 // loop_pre_header
        _
      $region64: #{deep_ptm_forward.4} parent=47 // loop_header
        %s522 = sphi 0, %s526
        %p523 = scmp.ge.s32.totalorder %s522, 8
      $region65: #{deep_ptm_forward.4} parent=47 // loop_header_branch
        %525 = sbr.rel (%p523) target = $region69
      $region66: #{deep_ptm_forward.4} parent=47 // loop_body
        %s527 = smul.u32 %s522, 2
        %s528 = scalar_lea.vmem [#allocation4], %s527
        %v529 = vld [vmem:[%s528] sm:$0x3]
        %v531 = vperm.slane %v520, 0
        %vm533 = vcmask 261120
        %v535 = vsel %vm533, %v529, 0
        %537 = vmatpush.msra.mxu0 0.0
        %538 = vmatpush.msra.mxu0 0.0
        %539 = vmatpush.msra.mxu0 0.0
        %540 = vmatpush.msra.mxu0 0.0
        %541 = vmatpush.msra.mxu0 0.0
        %542 = vmatpush.msra.mxu0 0.0
        %543 = vmatpush.msra.mxu0 0.0
        %544 = vmatpush.msra.mxu0 0.0
        %545 = vmatpush.msra.mxu0 0.0
        %546 = vmatpush.msra.mxu0 0.0
        %547 = vmatpush.msra.mxu0 0.0
        %548 = vmatpush.msra.mxu0 0.0
        %549 = vmatpush.msra.mxu0 %v517
        %550 = vmatpush.msra.mxu0 %v516
        %551 = vmatpush.msra.mxu0 %v515
        %552 = vmatpush.msra.mxu0 %v514
        %553 = vmatmul.f32.gmra.mxu0 %v535
        %v554 = vpop.f32.mrf.mxu0
        %v555 = vadd.f32 %v531, %v554
        %556 = vdwg.mxu0
        %s557 = scalar_lea.vmem [#allocation3], %s527
        %vm558 = vcmask 517120
        %559 = vst.msk [vmem:[%s557] sm:$0x3] %vm558, %v555
      $region67: #{deep_ptm_forward.4} parent=47 // loop_footer
        %s526 = sadd.s32 1, %s522
      $region68: #{deep_ptm_forward.4} parent=47 // loop_footer_branch
        %521 = sbr.rel target = $region64
      $region69: #{deep_ptm_forward.4} parent=47 // loop_exit
        _
      loop: start=0, step=1, limit=8
      $region70: #{deep_ptm_forward.4} parent=47 // loop_pre_header
        _
      $region71: #{deep_ptm_forward.4} parent=47 // loop_header
        %s561 = sphi 0, %s565
        %p562 = scmp.ge.s32.totalorder %s561, 8
        %v566 = vphi 0.0, %v634
        %v567 = vphi 0.0, %v628
      $region72: #{deep_ptm_forward.4} parent=47 // loop_header_branch
        %564 = sbr.rel (%p562) target = $region76
      $region73: #{deep_ptm_forward.4} parent=47 // loop_body
        %s568 = smul.u32 %s561, 2
        %s569 = scalar_lea.vmem [#allocation3], %s568
        %v570 = vld [vmem:[%s569] sm:$0x3]
        %572 = vrot.lane.b32.xlu0 %v566, 96
        %v573 = vpop.permute.xlu0 %572
        %vm574 = vcmask 130048
        %v575 = vsel %vm574, %v573, 0
        %577 = vmatpush.msra.mxu0 0.0
        %578 = vmatpush.msra.mxu0 0.0
        %579 = vmatpush.msra.mxu0 0.0
        %580 = vmatpush.msra.mxu0 0.0
        %581 = vmatpush.msra.mxu0 0.0
        %582 = vmatpush.msra.mxu0 0.0
        %583 = vmatpush.msra.mxu0 0.0
        %584 = vmatpush.msra.mxu0 0.0
        %585 = vmatpush.msra.mxu0 0.0
        %586 = vmatpush.msra.mxu0 0.0
        %587 = vmatpush.msra.mxu0 0.0
        %588 = vmatpush.msra.mxu0 0.0
        %589 = vmatpush.msra.mxu0 0.0
        %590 = vmatpush.msra.mxu0 0.0
        %591 = vmatpush.msra.mxu0 %v519
        %592 = vmatpush.msra.mxu0 %v518
        %593 = vmatmul.f32.gmra.mxu0 %v575
        %v594 = vpop.f32.mrf.mxu0
        %v595 = vadd.f32 0.0, %v594
        %596 = vdwg.mxu0
        %v597 = vadd.f32 %v570, %v595
        %v598 = vxor.u32 %v597, 2147483648
        %v599 = vmul.f32 %v598, 1.442695
        %v600 = vpow.pop %v599
        %v601 = vadd.f32 %v600, 1.0
        %v602 = vrcp.pop %v601
        %v603 = vmul.f32 %v601, %v602
        %v604 = vsub.f32 1.0, %v603
        %v605 = vmul.f32 %v602, %v604
        %v606 = vadd.f32 %v602, %v605
        %vm607 = vweird.f32 %v601
        %vm608 = vweird.f32 %v602
        %vm609 = vmor %vm607, %vm608
        %v610 = vsel %vm609, %v602, %v606
        %v611 = vand.u32 2147483647, %v601
        %vm612 = vcmp.eq.f32.partialorder %v611, 8.507059e+37
        %v613 = vand.u32 %v601, 2147483648
        %v614 = vor.u32 1.1754944e-38, %v613
        %v615 = vsel %vm612, %v614, %v610
        %v616 = vmul.f32 1.0, %v615
        %v617 = vtanh.pop %v597
        %v618 = vmul.f32 %v616, %v567
        %620 = vrot.lane.b32.xlu0 %v617, 80
        %v621 = vpop.permute.xlu0 %620
        %v623 = vmul.f32 %v616, %v621
        %625 = vrot.lane.b32.xlu0 %v623, 16
        %v626 = vpop.permute.xlu0 %625
        %v628 = vadd.f32 %v618, %v626
        %v629 = vtanh.pop %v628
        %631 = vrot.lane.b32.xlu0 %v629, 16
        %v632 = vpop.permute.xlu0 %631
        %v634 = vmul.f32 %v616, %v632
        %636 = vrot.lane.b32.xlu0 %v634, 96
        %v637 = vpop.permute.xlu0 %636
        %s639 = scalar_lea.vmem %s383, %s568
        %vm640 = vcmask 123904
        %641 = vst.msk [vmem:[%s639] sm:$0x3] %vm640, %v637
      $region74: #{deep_ptm_forward.4} parent=47 // loop_footer
        %s565 = sadd.s32 1, %s561
      $region75: #{deep_ptm_forward.4} parent=47 // loop_footer_branch
        %560 = sbr.rel target = $region71
      $region76: #{deep_ptm_forward.4} parent=47 // loop_exit
        _
      %p642 = scmp.lt.s32.totalorder %s18, 1
      %s643 = scalar_select %p642, %s18, 1
      %s644 = smul.addr %s643, 8
      %s645 = smul.addr %s644, 2
      %s646 = scalar_lea.vmem %s7, %s645
      // Predicated region
      $region77: #{deep_ptm_forward.4} parent=47 // pred_check
        %p647 = pneg %p218
      $region78: #{deep_ptm_forward.4} parent=47 // pred_check_branch
        %649 = sbr.rel (%p647) target = $region80
      $region79: #{deep_ptm_forward.4} parent=47 // pred_region
        _
      $region80: #{deep_ptm_forward.4} parent=47 // pred_fallthru
        _
    $region48: #{deep_ptm_forward.4} parent=5 // pred_fallthru
      _
    %p650 = scmp.le.s32.totalorder 2, %s13
    // Predicated region
    $region81: #{deep_ptm_forward.4} parent=5 // pred_check
      %p651 = pneg %p650
    $region82: #{deep_ptm_forward.4} parent=5 // pred_check_branch
      %653 = sbr.rel (%p651) target = $region84
    $region83: #{deep_ptm_forward.4} parent=5 // pred_region
      %s654 = ssub.s32 %s13, 2
      // Predicated region
      $region85: #{deep_ptm_forward.4} parent=83 // pred_check
        %p655 = pneg %p224
      $region86: #{deep_ptm_forward.4} parent=83 // pred_check_branch
        %657 = sbr.rel (%p655) target = $region88
      $region87: #{deep_ptm_forward.4} parent=83 // pred_region
        %p658 = scmp.lt.s32.totalorder %s19, 1
        %s659 = scalar_select %p658, %s19, 1
        %s660 = smul.addr %s659, 8
        %s661 = smul.addr %s660, 2
        %s662 = scalar_lea.vmem %s7, %s661
      $region88: #{deep_ptm_forward.4} parent=83 // pred_fallthru
        _
    $region84: #{deep_ptm_forward.4} parent=5 // pred_fallthru
      _
  $region6: #{deep_ptm_forward.4} parent=0 // loop_footer
    %s17 = sadd.s32 1, %s13
  $region7: #{deep_ptm_forward.4} parent=0 // loop_footer_branch
    %12 = sbr.rel target = $region3
  $region8: #{deep_ptm_forward.4} parent=0 // loop_exit
    _

// kernel: deep_ptm_forward.6
$region0: #{deep_ptm_forward.6}
  #allocation0 [shape = 'u32[]', space=smem, size = 0x4, offset = 0x4, fixed_abs, tag = 'smem constant byte address 0x4 - core index']
  #allocation1 [shape = 'u32[72,128]{1,0:T(1,128)}', space=vmem, size = 0x9000, scoped, tag = 'internal scratch']
  #allocation2 [shape = 'f32[8,2,128]{2,1,0:T(2,128)}', space=vmem, size = 0x2000, scoped, tag = 'scratch operand']
  #allocation3 [shape = 'f32[8,2,64]{2,1,0:T(2,128)}', space=vmem, size = 0x2000, scoped, tag = 'scratch operand']
  #allocation4 [shape = 'f32[8,2,32]{2,1,0:T(2,128)}', space=vmem, size = 0x2000, scoped, tag = 'scratch operand']
  %s0 = inlined_call_operand.vmem [shape: f32[2,8,2,8], index: 0, kind: input, shape index: {}]
  %s1 = inlined_call_operand.vmem [shape: f32[2,8,128], index: 1, kind: input, shape index: {}]
  %s2 = inlined_call_operand.vmem [shape: f32[2,32,128], index: 2, kind: input, shape index: {}]
  %s3 = inlined_call_operand.vmem [shape: f32[2,1,128], index: 3, kind: input, shape index: {}]
  %s4 = inlined_call_operand.vmem [shape: f32[2,32,64], index: 4, kind: input, shape index: {}]
  %s5 = inlined_call_operand.vmem [shape: f32[2,16,64], index: 5, kind: input, shape index: {}]
  %s6 = inlined_call_operand.vmem [shape: f32[2,1,64], index: 6, kind: input, shape index: {}]
  %s7 = inlined_call_operand.vmem [shape: f32[2,8,2,16], index: 7, kind: output, shape index: {}]
  %s8 = sld [smem:[#allocation0]]
  $region89: #{deep_ptm_forward.6} parent=0
    _
  %s10 = ssub.s32 1, %s8
  %s11 = scalar_select 0, %s10, %s8
  loop: start=0, step=1, limit=4
  $region2: #{deep_ptm_forward.6} parent=0 // loop_pre_header
    _
  $region3: #{deep_ptm_forward.6} parent=0 // loop_header
    %s13 = sphi 0, %s17
    %p14 = scmp.ge.s32.totalorder %s13, 4
    %s23 = sphi 0, %s25
    %s26 = sphi 0, %s23
    %s27 = sphi 0, %s26
    %s43 = sphi 0, %s27
    %s49 = sphi 0, %s51
    %s52 = sphi 0, %s49
    %s53 = sphi 0, %s52
    %s69 = sphi 0, %s53
    %s75 = sphi 0, %s77
    %s78 = sphi 0, %s75
    %s79 = sphi 0, %s78
    %s95 = sphi 0, %s79
    %s101 = sphi 0, %s103
    %s104 = sphi 0, %s101
    %s105 = sphi 0, %s104
    %s121 = sphi 0, %s105
    %s127 = sphi 0, %s129
    %s130 = sphi 0, %s127
    %s131 = sphi 0, %s130
    %s147 = sphi 0, %s131
    %s153 = sphi 0, %s155
    %s156 = sphi 0, %s153
    %s157 = sphi 0, %s156
    %s173 = sphi 0, %s157
    %s179 = sphi 0, %s181
    %s182 = sphi 0, %s179
    %s183 = sphi 0, %s182
    %s199 = sphi 0, %s183
    %s205 = sphi 0, %s207
    %s208 = sphi 0, %s205
    %s209 = sphi 0, %s208
    %s225 = sphi 0, %s209
  $region4: #{deep_ptm_forward.6} parent=0 // loop_header_branch
    %16 = sbr.rel (%p14) target = $region8
  $region5: #{deep_ptm_forward.6} parent=0 // loop_body
    %s18 = ssub.s32 %s13, 1
    %s19 = ssub.s32 %s13, 2
    %s20 = sadd.s32 %s13, 1
    %s21 = ssub.s32 %s13, %s20
    %p22 = scmp.eq.s32.totalorder %s21, 0
    %s24 = sadd.s32 %s23, 1
    %s25 = scalar_select %p22, %s23, %s24
    %p28 = pneg %p22
    %p29 = scmp.eq.s32.totalorder %s13, 1
    %p30 = por %p28, %p29
    %p31 = scmp.ne.s32.totalorder %s23, %s26
    %p32 = scmp.eq.s32.totalorder %s13, 0
    %p33 = por %p31, %p32
    %p34 = scmp.ne.s32.totalorder %s23, %s26
    %p35 = scmp.eq.s32.totalorder %s18, 1
    %p36 = por %p34, %p35
    %p37 = scmp.ne.s32.totalorder %s26, %s27
    %p38 = scmp.eq.s32.totalorder %s18, 0
    %p39 = por %p37, %p38
    %p40 = scmp.ne.s32.totalorder %s26, %s27
    %p41 = scmp.eq.s32.totalorder %s19, 1
    %p42 = por %p40, %p41
    %p44 = scmp.ne.s32.totalorder %s27, %s43
    %p45 = scmp.eq.s32.totalorder %s19, 0
    %p46 = por %p44, %p45
    %s47 = ssub.s32 %s13, %s20
    %p48 = scmp.eq.s32.totalorder %s47, 0
    %s50 = sadd.s32 %s49, 1
    %s51 = scalar_select %p48, %s49, %s50
    %p54 = pneg %p48
    %p55 = scmp.eq.s32.totalorder %s13, 1
    %p56 = por %p54, %p55
    %p57 = scmp.ne.s32.totalorder %s49, %s52
    %p58 = scmp.eq.s32.totalorder %s13, 0
    %p59 = por %p57, %p58
    %p60 = scmp.ne.s32.totalorder %s49, %s52
    %p61 = scmp.eq.s32.totalorder %s18, 1
    %p62 = por %p60, %p61
    %p63 = scmp.ne.s32.totalorder %s52, %s53
    %p64 = scmp.eq.s32.totalorder %s18, 0
    %p65 = por %p63, %p64
    %p66 = scmp.ne.s32.totalorder %s52, %s53
    %p67 = scmp.eq.s32.totalorder %s19, 1
    %p68 = por %p66, %p67
    %p70 = scmp.ne.s32.totalorder %s53, %s69
    %p71 = scmp.eq.s32.totalorder %s19, 0
    %p72 = por %p70, %p71
    %s73 = ssub.s32 %s13, %s20
    %p74 = scmp.eq.s32.totalorder %s73, 0
    %s76 = sadd.s32 %s75, 1
    %s77 = scalar_select %p74, %s75, %s76
    %p80 = pneg %p74
    %p81 = scmp.eq.s32.totalorder %s13, 1
    %p82 = por %p80, %p81
    %p83 = scmp.ne.s32.totalorder %s75, %s78
    %p84 = scmp.eq.s32.totalorder %s13, 0
    %p85 = por %p83, %p84
    %p86 = scmp.ne.s32.totalorder %s75, %s78
    %p87 = scmp.eq.s32.totalorder %s18, 1
    %p88 = por %p86, %p87
    %p89 = scmp.ne.s32.totalorder %s78, %s79
    %p90 = scmp.eq.s32.totalorder %s18, 0
    %p91 = por %p89, %p90
    %p92 = scmp.ne.s32.totalorder %s78, %s79
    %p93 = scmp.eq.s32.totalorder %s19, 1
    %p94 = por %p92, %p93
    %p96 = scmp.ne.s32.totalorder %s79, %s95
    %p97 = scmp.eq.s32.totalorder %s19, 0
    %p98 = por %p96, %p97
    %s99 = ssub.s32 %s13, %s20
    %p100 = scmp.eq.s32.totalorder %s99, 0
    %s102 = sadd.s32 %s101, 1
    %s103 = scalar_select %p100, %s101, %s102
    %p106 = pneg %p100
    %p107 = scmp.eq.s32.totalorder %s13, 1
    %p108 = por %p106, %p107
    %p109 = scmp.ne.s32.totalorder %s101, %s104
    %p110 = scmp.eq.s32.totalorder %s13, 0
    %p111 = por %p109, %p110
    %p112 = scmp.ne.s32.totalorder %s101, %s104
    %p113 = scmp.eq.s32.totalorder %s18, 1
    %p114 = por %p112, %p113
    %p115 = scmp.ne.s32.totalorder %s104, %s105
    %p116 = scmp.eq.s32.totalorder %s18, 0
    %p117 = por %p115, %p116
    %p118 = scmp.ne.s32.totalorder %s104, %s105
    %p119 = scmp.eq.s32.totalorder %s19, 1
    %p120 = por %p118, %p119
    %p122 = scmp.ne.s32.totalorder %s105, %s121
    %p123 = scmp.eq.s32.totalorder %s19, 0
    %p124 = por %p122, %p123
    %s125 = ssub.s32 %s13, %s20
    %p126 = scmp.eq.s32.totalorder %s125, 0
    %s128 = sadd.s32 %s127, 1
    %s129 = scalar_select %p126, %s127, %s128
    %p132 = pneg %p126
    %p133 = scmp.eq.s32.totalorder %s13, 1
    %p134 = por %p132, %p133
    %p135 = scmp.ne.s32.totalorder %s127, %s130
    %p136 = scmp.eq.s32.totalorder %s13, 0
    %p137 = por %p135, %p136
    %p138 = scmp.ne.s32.totalorder %s127, %s130
    %p139 = scmp.eq.s32.totalorder %s18, 1
    %p140 = por %p138, %p139
    %p141 = scmp.ne.s32.totalorder %s130, %s131
    %p142 = scmp.eq.s32.totalorder %s18, 0
    %p143 = por %p141, %p142
    %p144 = scmp.ne.s32.totalorder %s130, %s131
    %p145 = scmp.eq.s32.totalorder %s19, 1
    %p146 = por %p144, %p145
    %p148 = scmp.ne.s32.totalorder %s131, %s147
    %p149 = scmp.eq.s32.totalorder %s19, 0
    %p150 = por %p148, %p149
    %s151 = ssub.s32 %s13, %s20
    %p152 = scmp.eq.s32.totalorder %s151, 0
    %s154 = sadd.s32 %s153, 1
    %s155 = scalar_select %p152, %s153, %s154
    %p158 = pneg %p152
    %p159 = scmp.eq.s32.totalorder %s13, 1
    %p160 = por %p158, %p159
    %p161 = scmp.ne.s32.totalorder %s153, %s156
    %p162 = scmp.eq.s32.totalorder %s13, 0
    %p163 = por %p161, %p162
    %p164 = scmp.ne.s32.totalorder %s153, %s156
    %p165 = scmp.eq.s32.totalorder %s18, 1
    %p166 = por %p164, %p165
    %p167 = scmp.ne.s32.totalorder %s156, %s157
    %p168 = scmp.eq.s32.totalorder %s18, 0
    %p169 = por %p167, %p168
    %p170 = scmp.ne.s32.totalorder %s156, %s157
    %p171 = scmp.eq.s32.totalorder %s19, 1
    %p172 = por %p170, %p171
    %p174 = scmp.ne.s32.totalorder %s157, %s173
    %p175 = scmp.eq.s32.totalorder %s19, 0
    %p176 = por %p174, %p175
    %s177 = ssub.s32 %s13, %s20
    %p178 = scmp.eq.s32.totalorder %s177, 0
    %s180 = sadd.s32 %s179, 1
    %s181 = scalar_select %p178, %s179, %s180
    %p184 = pneg %p178
    %p185 = scmp.eq.s32.totalorder %s13, 1
    %p186 = por %p184, %p185
    %p187 = scmp.ne.s32.totalorder %s179, %s182
    %p188 = scmp.eq.s32.totalorder %s13, 0
    %p189 = por %p187, %p188
    %p190 = scmp.ne.s32.totalorder %s179, %s182
    %p191 = scmp.eq.s32.totalorder %s18, 1
    %p192 = por %p190, %p191
    %p193 = scmp.ne.s32.totalorder %s182, %s183
    %p194 = scmp.eq.s32.totalorder %s18, 0
    %p195 = por %p193, %p194
    %p196 = scmp.ne.s32.totalorder %s182, %s183
    %p197 = scmp.eq.s32.totalorder %s19, 1
    %p198 = por %p196, %p197
    %p200 = scmp.ne.s32.totalorder %s183, %s199
    %p201 = scmp.eq.s32.totalorder %s19, 0
    %p202 = por %p200, %p201
    %s203 = ssub.s32 %s13, %s20
    %p204 = scmp.eq.s32.totalorder %s203, 0
    %s206 = sadd.s32 %s205, 1
    %s207 = scalar_select %p204, %s205, %s206
    %p210 = pneg %p204
    %p211 = scmp.eq.s32.totalorder %s13, 1
    %p212 = por %p210, %p211
    %p213 = scmp.ne.s32.totalorder %s205, %s208
    %p214 = scmp.eq.s32.totalorder %s13, 0
    %p215 = por %p213, %p214
    %p216 = scmp.ne.s32.totalorder %s205, %s208
    %p217 = scmp.eq.s32.totalorder %s18, 1
    %p218 = por %p216, %p217
    %p219 = scmp.ne.s32.totalorder %s208, %s209
    %p220 = scmp.eq.s32.totalorder %s18, 0
    %p221 = por %p219, %p220
    %p222 = scmp.ne.s32.totalorder %s208, %s209
    %p223 = scmp.eq.s32.totalorder %s19, 1
    %p224 = por %p222, %p223
    %p226 = scmp.ne.s32.totalorder %s209, %s225
    %p227 = scmp.eq.s32.totalorder %s19, 0
    %p228 = por %p226, %p227
    %p229 = scmp.le.s32.totalorder 1, %s13
    %p230 = scmp.lt.s32.totalorder %s13, 3
    %p231 = pnand %p229, %p230
    %p232 = pneg %p231
    // Predicated region
    $region9: #{deep_ptm_forward.6} parent=5 // pred_check
      _
    $region10: #{deep_ptm_forward.6} parent=5 // pred_check_branch
      %234 = sbr.rel (%p231) target = $region12
    $region11: #{deep_ptm_forward.6} parent=5 // pred_region
      %s235 = ssub.s32 %s13, 1
    $region12: #{deep_ptm_forward.6} parent=5 // pred_fallthru
      _
    %p236 = scmp.lt.s32.totalorder %s13, 2
    // Predicated region
    $region13: #{deep_ptm_forward.6} parent=5 // pred_check
      %p237 = pneg %p236
    $region14: #{deep_ptm_forward.6} parent=5 // pred_check_branch
      %239 = sbr.rel (%p237) target = $region16
    $region15: #{deep_ptm_forward.6} parent=5 // pred_region
      // Predicated region
      $region17: #{deep_ptm_forward.6} parent=15 // pred_check
        %p240 = pneg %p33
      $region18: #{deep_ptm_forward.6} parent=15 // pred_check_branch
        %242 = sbr.rel (%p240) target = $region20
      $region19: #{deep_ptm_forward.6} parent=15 // pred_region
        %p243 = scmp.lt.s32.totalorder %s13, 1
        %s244 = scalar_select %p243, %s13, 1
        %s245 = smul.addr %s244, 8
        %s246 = smul.addr %s245, 2
        %s247 = scalar_lea.vmem %s0, %s246
      $region20: #{deep_ptm_forward.6} parent=15 // pred_fallthru
        _
      // Predicated region
      $region21: #{deep_ptm_forward.6} parent=15 // pred_check
        %p248 = pneg %p59
      $region22: #{deep_ptm_forward.6} parent=15 // pred_check_branch
        %250 = sbr.rel (%p248) target = $region24
      $region23: #{deep_ptm_forward.6} parent=15 // pred_region
        %p251 = scmp.lt.s32.totalorder %s13, 1
        %s252 = scalar_select %p251, %s13, 1
        %s253 = smul.addr %s252, 8
        %s254 = scalar_lea.vmem %s1, %s253
      $region24: #{deep_ptm_forward.6} parent=15 // pred_fallthru
        _
      // Predicated region
      $region25: #{deep_ptm_forward.6} parent=15 // pred_check
        %p255 = pneg %p85
      $region26: #{deep_ptm_forward.6} parent=15 // pred_check_branch
        %257 = sbr.rel (%p255) target = $region28
      $region27: #{deep_ptm_forward.6} parent=15 // pred_region
        %p258 = scmp.lt.s32.totalorder %s13, 1
        %s259 = scalar_select %p258, %s13, 1
        %s260 = smul.addr %s259, 4
        %s261 = smul.addr %s260, 8
        %s262 = scalar_lea.vmem %s2, %s261
      $region28: #{deep_ptm_forward.6} parent=15 // pred_fallthru
        _
      // Predicated region
      $region29: #{deep_ptm_forward.6} parent=15 // pred_check
        %p263 = pneg %p111
      $region30: #{deep_ptm_forward.6} parent=15 // pred_check_branch
        %265 = sbr.rel (%p263) target = $region32
      $region31: #{deep_ptm_forward.6} parent=15 // pred_region
        %p266 = scmp.lt.s32.totalorder %s13, 1
        %s267 = scalar_select %p266, %s13, 1
        %s268 = scalar_lea.vmem %s3, %s267
      $region32: #{deep_ptm_forward.6} parent=15 // pred_fallthru
        _
      // Predicated region
      $region33: #{deep_ptm_forward.6} parent=15 // pred_check
        %p269 = pneg %p137
      $region34: #{deep_ptm_forward.6} parent=15 // pred_check_branch
        %271 = sbr.rel (%p269) target = $region36
      $region35: #{deep_ptm_forward.6} parent=15 // pred_region
        %p272 = scmp.lt.s32.totalorder %s13, 1
        %s273 = scalar_select %p272, %s13, 1
        %s274 = smul.addr %s273, 4
        %s275 = smul.addr %s274, 8
        %s276 = scalar_lea.vmem %s4, %s275
      $region36: #{deep_ptm_forward.6} parent=15 // pred_fallthru
        _
      // Predicated region
      $region37: #{deep_ptm_forward.6} parent=15 // pred_check
        %p277 = pneg %p163
      $region38: #{deep_ptm_forward.6} parent=15 // pred_check_branch
        %279 = sbr.rel (%p277) target = $region40
      $region39: #{deep_ptm_forward.6} parent=15 // pred_region
        %p280 = scmp.lt.s32.totalorder %s13, 1
        %s281 = scalar_select %p280, %s13, 1
        %s282 = smul.addr %s281, 2
        %s283 = smul.addr %s282, 8
        %s284 = scalar_lea.vmem %s5, %s283
      $region40: #{deep_ptm_forward.6} parent=15 // pred_fallthru
        _
      // Predicated region
      $region41: #{deep_ptm_forward.6} parent=15 // pred_check
        %p285 = pneg %p189
      $region42: #{deep_ptm_forward.6} parent=15 // pred_check_branch
        %287 = sbr.rel (%p285) target = $region44
      $region43: #{deep_ptm_forward.6} parent=15 // pred_region
        %p288 = scmp.lt.s32.totalorder %s13, 1
        %s289 = scalar_select %p288, %s13, 1
        %s290 = scalar_lea.vmem %s6, %s289
      $region44: #{deep_ptm_forward.6} parent=15 // pred_fallthru
        _
    $region16: #{deep_ptm_forward.6} parent=5 // pred_fallthru
      _
    %p291 = scmp.le.s32.totalorder 1, %s13
    %p292 = scmp.lt.s32.totalorder %s13, 3
    %p293 = pnand %p291, %p292
    %p294 = pneg %p293
    // Predicated region
    $region45: #{deep_ptm_forward.6} parent=5 // pred_check
      _
    $region46: #{deep_ptm_forward.6} parent=5 // pred_check_branch
      %296 = sbr.rel (%p293) target = $region48
    $region47: #{deep_ptm_forward.6} parent=5 // pred_region
      %s297 = ssub.s32 %s13, 1
      %p298 = scmp.lt.s32.totalorder %s18, 1
      %s299 = scalar_select %p298, %s18, 1
      %s300 = smul.addr %s299, 8
      %s301 = smul.addr %s300, 2
      %s302 = scalar_lea.vmem %s0, %s301
      %p303 = pneg %p39
      %p304 = pneg %p36
      %p305 = scmp.lt.s32.totalorder %s18, 1
      %s306 = scalar_select %p305, %s18, 1
      %s307 = smul.addr %s306, 8
      %s308 = scalar_lea.vmem %s1, %s307
      %p309 = pneg %p65
      %p310 = pneg %p62
      %p311 = scmp.lt.s32.totalorder %s18, 1
      %s312 = scalar_select %p311, %s18, 1
      %s313 = smul.addr %s312, 4
      %s314 = smul.addr %s313, 8
      %s315 = scalar_lea.vmem %s2, %s314
      %p316 = pneg %p91
      %p317 = pneg %p88
      %p318 = scmp.lt.s32.totalorder %s18, 1
      %s319 = scalar_select %p318, %s18, 1
      %s320 = scalar_lea.vmem %s3, %s319
      %p321 = pneg %p117
      %p322 = pneg %p114
      %p323 = scmp.lt.s32.totalorder %s18, 1
      %s324 = scalar_select %p323, %s18, 1
      %s325 = smul.addr %s324, 4
      %s326 = smul.addr %s325, 8
      %s327 = scalar_lea.vmem %s4, %s326
      %p328 = pneg %p143
      %p329 = pneg %p140
      %p330 = scmp.lt.s32.totalorder %s18, 1
      %s331 = scalar_select %p330, %s18, 1
      %s332 = smul.addr %s331, 2
      %s333 = smul.addr %s332, 8
      %s334 = scalar_lea.vmem %s5, %s333
      %p335 = pneg %p169
      %p336 = pneg %p166
      %p337 = scmp.lt.s32.totalorder %s18, 1
      %s338 = scalar_select %p337, %s18, 1
      %s339 = scalar_lea.vmem %s6, %s338
      %p340 = pneg %p195
      %p341 = pneg %p192
      %p342 = pneg %p221
      %p343 = pneg %p218
      %p344 = scmp.lt.s32.totalorder %s18, 1
      %s345 = scalar_select %p344, %s18, 1
      %s346 = smul.addr %s345, 8
      %s347 = smul.addr %s346, 2
      %s348 = scalar_lea.vmem %s7, %s347
      %p349 = scmp.lt.s32.totalorder %s18, 1
      %s350 = scalar_select %p349, %s18, 1
      %s351 = smul.addr %s350, 8
      %s352 = smul.addr %s351, 2
      %s353 = scalar_lea.vmem %s0, %s352
      %p354 = scmp.lt.s32.totalorder %s18, 1
      %s355 = scalar_select %p354, %s18, 1
      %s356 = smul.addr %s355, 8
      %s357 = scalar_lea.vmem %s1, %s356
      %p358 = scmp.lt.s32.totalorder %s18, 1
      %s359 = scalar_select %p358, %s18, 1
      %s360 = smul.addr %s359, 4
      %s361 = smul.addr %s360, 8
      %s362 = scalar_lea.vmem %s2, %s361
      %p363 = scmp.lt.s32.totalorder %s18, 1
      %s364 = scalar_select %p363, %s18, 1
      %s365 = scalar_lea.vmem %s3, %s364
      %p366 = scmp.lt.s32.totalorder %s18, 1
      %s367 = scalar_select %p366, %s18, 1
      %s368 = smul.addr %s367, 4
      %s369 = smul.addr %s368, 8
      %s370 = scalar_lea.vmem %s4, %s369
      %p371 = scmp.lt.s32.totalorder %s18, 1
      %s372 = scalar_select %p371, %s18, 1
      %s373 = smul.addr %s372, 2
      %s374 = smul.addr %s373, 8
      %s375 = scalar_lea.vmem %s5, %s374
      %p376 = scmp.lt.s32.totalorder %s18, 1
      %s377 = scalar_select %p376, %s18, 1
      %s378 = scalar_lea.vmem %s6, %s377
      %p379 = scmp.lt.s32.totalorder %s18, 1
      %s380 = scalar_select %p379, %s18, 1
      %s381 = smul.addr %s380, 8
      %s382 = smul.addr %s381, 2
      %s383 = scalar_lea.vmem %s7, %s382
      %v384 = vld [vmem:[%s357] sm:$0xff]
      %v385 = vld [vmem:[%s362] sm:$0xff]
      %v386 = vld [vmem:[%s362 + $0x8] sm:$0xff]
      %v387 = vld [vmem:[%s362 + $0x10] sm:$0xff]
      %v388 = vld [vmem:[%s362 + $0x18] sm:$0xff]
      %v389 = vld [vmem:[%s365] sm:$0x1]
      loop: start=0, step=1, limit=8
      $region49: #{deep_ptm_forward.6} parent=47 // loop_pre_header
        _
      $region50: #{deep_ptm_forward.6} parent=47 // loop_header
        %s391 = sphi 0, %s395
        %p392 = scmp.ge.s32.totalorder %s391, 8
      $region51: #{deep_ptm_forward.6} parent=47 // loop_header_branch
        %394 = sbr.rel (%p392) target = $region55
      $region52: #{deep_ptm_forward.6} parent=47 // loop_body
        %s396 = smul.u32 %s391, 2
        %s397 = scalar_lea.vmem %s353, %s396
        %v398 = vld [vmem:[%s397] sm:$0x3]
        %v400 = vperm.slane %v389, 0
        %vm402 = vcmask 64512
        %v404 = vsel %vm402, %v398, 0
        %406 = vmatpush.msra.mxu0 0.0
        %407 = vmatpush.msra.mxu0 0.0
        %408 = vmatpush.msra.mxu0 0.0
        %409 = vmatpush.msra.mxu0 0.0
        %410 = vmatpush.msra.mxu0 0.0
        %411 = vmatpush.msra.mxu0 0.0
        %412 = vmatpush.msra.mxu0 0.0
        %413 = vmatpush.msra.mxu0 0.0
        %414 = vmatpush.msra.mxu0 0.0
        %415 = vmatpush.msra.mxu0 0.0
        %416 = vmatpush.msra.mxu0 0.0
        %417 = vmatpush.msra.mxu0 0.0
        %418 = vmatpush.msra.mxu0 0.0
        %419 = vmatpush.msra.mxu0 0.0
        %420 = vmatpush.msra.mxu0 0.0
        %421 = vmatpush.msra.mxu0 %v384
        %422 = vmatmul.f32.gmra.mxu0 %v404
        %v423 = vpop.f32.mrf.mxu0
        %v424 = vadd.f32 %v400, %v423
        %425 = vdwg.mxu0
        %s426 = scalar_lea.vmem [#allocation2], %s396
        %427 = vst [vmem:[%s426] sm:$0x3] %v424
      $region53: #{deep_ptm_forward.6} parent=47 // loop_footer
        %s395 = sadd.s32 1, %s391
      $region54: #{deep_ptm_forward.6} parent=47 // loop_footer_branch
        %390 = sbr.rel target = $region50
      $region55: #{deep_ptm_forward.6} parent=47 // loop_exit
        _
      loop: start=0, step=1, limit=8
      $region56: #{deep_ptm_forward.6} parent=47 // loop_pre_header
        _
      $region57: #{deep_ptm_forward.6} parent=47 // loop_header
        %s429 = sphi 0, %s433
        %p430 = scmp.ge.s32.totalorder %s429, 8
        %v434 = vphi 0.0, %v502
        %v435 = vphi 0.0, %v496
      $region58: #{deep_ptm_forward.6} parent=47 // loop_header_branch
        %432 = sbr.rel (%p430) target = $region62
      $region59: #{deep_ptm_forward.6} parent=47 // loop_body
        %s436 = smul.u32 %s429, 2
        %s437 = scalar_lea.vmem [#allocation2], %s436
        %v438 = vld [vmem:[%s437] sm:$0x3]
        %440 = vrot.lane.b32.xlu0 %v434, 64
        %v441 = vpop.permute.xlu0 %440
        %vm442 = vcmask 261120
        %v443 = vsel %vm442, %v441, 0
        %445 = vmatpush.msra.mxu0 0.0
        %446 = vmatpush.msra.mxu0 0.0
        %447 = vmatpush.msra.mxu0 0.0
        %448 = vmatpush.msra.mxu0 0.0
        %449 = vmatpush.msra.mxu0 0.0
        %450 = vmatpush.msra.mxu0 0.0
        %451 = vmatpush.msra.mxu0 0.0
        %452 = vmatpush.msra.mxu0 0.0
        %453 = vmatpush.msra.mxu0 0.0
        %454 = vmatpush.msra.mxu0 0.0
        %455 = vmatpush.msra.mxu0 0.0
        %456 = vmatpush.msra.mxu0 0.0
        %457 = vmatpush.msra.mxu0 %v388
        %458 = vmatpush.msra.mxu0 %v387
        %459 = vmatpush.msra.mxu0 %v386
        %460 = vmatpush.msra.mxu0 %v385
        %461 = vmatmul.f32.gmra.mxu0 %v443
        %v462 = vpop.f32.mrf.mxu0
        %v463 = vadd.f32 0.0, %v462
        %464 = vdwg.mxu0
        %v465 = vadd.f32 %v438, %v463
        %v466 = vxor.u32 %v465, 2147483648
        %v467 = vmul.f32 %v466, 1.442695
        %v468 = vpow.pop %v467
        %v469 = vadd.f32 %v468, 1.0
        %v470 = vrcp.pop %v469
        %v471 = vmul.f32 %v469, %v470
        %v472 = vsub.f32 1.0, %v471
        %v473 = vmul.f32 %v470, %v472
        %v474 = vadd.f32 %v470, %v473
        %vm475 = vweird.f32 %v469
        %vm476 = vweird.f32 %v470
        %vm477 = vmor %vm475, %vm476
        %v478 = vsel %vm477, %v470, %v474
        %v479 = vand.u32 2147483647, %v469
        %vm480 = vcmp.eq.f32.partialorder %v479, 8.507059e+37
        %v481 = vand.u32 %v469, 2147483648
        %v482 = vor.u32 1.1754944e-38, %v481
        %v483 = vsel %vm480, %v482, %v478
        %v484 = vmul.f32 1.0, %v483
        %v485 = vtanh.pop %v465
        %v486 = vmul.f32 %v484, %v435
        %488 = vrot.lane.b32.xlu0 %v485, 32
        %v489 = vpop.permute.xlu0 %488
        %v491 = vmul.f32 %v484, %v489
        %493 = vrot.lane.b32.xlu0 %v491, 32
        %v494 = vpop.permute.xlu0 %493
        %v496 = vadd.f32 %v486, %v494
        %v497 = vtanh.pop %v496
        %499 = vrot.lane.b32.xlu0 %v497, 32
        %v500 = vpop.permute.xlu0 %499
        %v502 = vmul.f32 %v484, %v500
        %504 = vrot.lane.b32.xlu0 %v502, 64
        %v505 = vpop.permute.xlu0 %504
        %s507 = scalar_lea.vmem [#allocation4], %s436
        %vm508 = vcmask 254976
        %509 = vst.msk [vmem:[%s507] sm:$0x3] %vm508, %v505
      $region60: #{deep_ptm_forward.6} parent=47 // loop_footer
        %s433 = sadd.s32 1, %s429
      $region61: #{deep_ptm_forward.6} parent=47 // loop_footer_branch
        %428 = sbr.rel target = $region57
      $region62: #{deep_ptm_forward.6} parent=47 // loop_exit
        _
      %v510 = vld [vmem:[%s370] sm:$0xff]
      %v511 = vld [vmem:[%s370 + $0x8] sm:$0xff]
      %v512 = vld [vmem:[%s370 + $0x10] sm:$0xff]
      %v513 = vld [vmem:[%s370 + $0x18] sm:$0xff]
      %v514 = vld [vmem:[%s375] sm:$0xff]
      %v515 = vld [vmem:[%s375 + $0x8] sm:$0xff]
      %v516 = vld [vmem:[%s378] sm:$0x1]
      loop: start=0, step=1, limit=8
      $region63: #{deep_ptm_forward.6} parent=47 // loop_pre_header
        _
      $region64: #{deep_ptm_forward.6} parent=47 // loop_header
        %s518 = sphi 0, %s522
        %p519 = scmp.ge.s32.totalorder %s518, 8
      $region65: #{deep_ptm_forward.6} parent=47 // loop_header_branch
        %521 = sbr.rel (%p519) target = $region69
      $region66: #{deep_ptm_forward.6} parent=47 // loop_body
        %s523 = smul.u32 %s518, 2
        %s524 = scalar_lea.vmem [#allocation4], %s523
        %v525 = vld [vmem:[%s524] sm:$0x3]
        %v527 = vperm.slane %v516, 0
        %vm529 = vcmask 261120
        %v531 = vsel %vm529, %v525, 0
        %533 = vmatpush.msra.mxu0 0.0
        %534 = vmatpush.msra.mxu0 0.0
        %535 = vmatpush.msra.mxu0 0.0
        %536 = vmatpush.msra.mxu0 0.0
        %537 = vmatpush.msra.mxu0 0.0
        %538 = vmatpush.msra.mxu0 0.0
        %539 = vmatpush.msra.mxu0 0.0
        %540 = vmatpush.msra.mxu0 0.0
        %541 = vmatpush.msra.mxu0 0.0
        %542 = vmatpush.msra.mxu0 0.0
        %543 = vmatpush.msra.mxu0 0.0
        %544 = vmatpush.msra.mxu0 0.0
        %545 = vmatpush.msra.mxu0 %v513
        %546 = vmatpush.msra.mxu0 %v512
        %547 = vmatpush.msra.mxu0 %v511
        %548 = vmatpush.msra.mxu0 %v510
        %549 = vmatmul.f32.gmra.mxu0 %v531
        %v550 = vpop.f32.mrf.mxu0
        %v551 = vadd.f32 %v527, %v550
        %552 = vdwg.mxu0
        %s553 = scalar_lea.vmem [#allocation3], %s523
        %vm554 = vcmask 517120
        %555 = vst.msk [vmem:[%s553] sm:$0x3] %vm554, %v551
      $region67: #{deep_ptm_forward.6} parent=47 // loop_footer
        %s522 = sadd.s32 1, %s518
      $region68: #{deep_ptm_forward.6} parent=47 // loop_footer_branch
        %517 = sbr.rel target = $region64
      $region69: #{deep_ptm_forward.6} parent=47 // loop_exit
        _
      loop: start=0, step=1, limit=8
      $region70: #{deep_ptm_forward.6} parent=47 // loop_pre_header
        _
      $region71: #{deep_ptm_forward.6} parent=47 // loop_header
        %s557 = sphi 0, %s561
        %p558 = scmp.ge.s32.totalorder %s557, 8
        %v562 = vphi 0.0, %v630
        %v563 = vphi 0.0, %v624
      $region72: #{deep_ptm_forward.6} parent=47 // loop_header_branch
        %560 = sbr.rel (%p558) target = $region76
      $region73: #{deep_ptm_forward.6} parent=47 // loop_body
        %s564 = smul.u32 %s557, 2
        %s565 = scalar_lea.vmem [#allocation3], %s564
        %v566 = vld [vmem:[%s565] sm:$0x3]
        %568 = vrot.lane.b32.xlu0 %v562, 96
        %v569 = vpop.permute.xlu0 %568
        %vm570 = vcmask 130048
        %v571 = vsel %vm570, %v569, 0
        %573 = vmatpush.msra.mxu0 0.0
        %574 = vmatpush.msra.mxu0 0.0
        %575 = vmatpush.msra.mxu0 0.0
        %576 = vmatpush.msra.mxu0 0.0
        %577 = vmatpush.msra.mxu0 0.0
        %578 = vmatpush.msra.mxu0 0.0
        %579 = vmatpush.msra.mxu0 0.0
        %580 = vmatpush.msra.mxu0 0.0
        %581 = vmatpush.msra.mxu0 0.0
        %582 = vmatpush.msra.mxu0 0.0
        %583 = vmatpush.msra.mxu0 0.0
        %584 = vmatpush.msra.mxu0 0.0
        %585 = vmatpush.msra.mxu0 0.0
        %586 = vmatpush.msra.mxu0 0.0
        %587 = vmatpush.msra.mxu0 %v515
        %588 = vmatpush.msra.mxu0 %v514
        %589 = vmatmul.f32.gmra.mxu0 %v571
        %v590 = vpop.f32.mrf.mxu0
        %v591 = vadd.f32 0.0, %v590
        %592 = vdwg.mxu0
        %v593 = vadd.f32 %v566, %v591
        %v594 = vxor.u32 %v593, 2147483648
        %v595 = vmul.f32 %v594, 1.442695
        %v596 = vpow.pop %v595
        %v597 = vadd.f32 %v596, 1.0
        %v598 = vrcp.pop %v597
        %v599 = vmul.f32 %v597, %v598
        %v600 = vsub.f32 1.0, %v599
        %v601 = vmul.f32 %v598, %v600
        %v602 = vadd.f32 %v598, %v601
        %vm603 = vweird.f32 %v597
        %vm604 = vweird.f32 %v598
        %vm605 = vmor %vm603, %vm604
        %v606 = vsel %vm605, %v598, %v602
        %v607 = vand.u32 2147483647, %v597
        %vm608 = vcmp.eq.f32.partialorder %v607, 8.507059e+37
        %v609 = vand.u32 %v597, 2147483648
        %v610 = vor.u32 1.1754944e-38, %v609
        %v611 = vsel %vm608, %v610, %v606
        %v612 = vmul.f32 1.0, %v611
        %v613 = vtanh.pop %v593
        %v614 = vmul.f32 %v612, %v563
        %616 = vrot.lane.b32.xlu0 %v613, 80
        %v617 = vpop.permute.xlu0 %616
        %v619 = vmul.f32 %v612, %v617
        %621 = vrot.lane.b32.xlu0 %v619, 16
        %v622 = vpop.permute.xlu0 %621
        %v624 = vadd.f32 %v614, %v622
        %v625 = vtanh.pop %v624
        %627 = vrot.lane.b32.xlu0 %v625, 16
        %v628 = vpop.permute.xlu0 %627
        %v630 = vmul.f32 %v612, %v628
        %632 = vrot.lane.b32.xlu0 %v630, 96
        %v633 = vpop.permute.xlu0 %632
        %s635 = scalar_lea.vmem %s383, %s564
        %vm636 = vcmask 123904
        %637 = vst.msk [vmem:[%s635] sm:$0x3] %vm636, %v633
      $region74: #{deep_ptm_forward.6} parent=47 // loop_footer
        %s561 = sadd.s32 1, %s557
      $region75: #{deep_ptm_forward.6} parent=47 // loop_footer_branch
        %556 = sbr.rel target = $region71
      $region76: #{deep_ptm_forward.6} parent=47 // loop_exit
        _
      %p638 = scmp.lt.s32.totalorder %s18, 1
      %s639 = scalar_select %p638, %s18, 1
      %s640 = smul.addr %s639, 8
      %s641 = smul.addr %s640, 2
      %s642 = scalar_lea.vmem %s7, %s641
      // Predicated region
      $region77: #{deep_ptm_forward.6} parent=47 // pred_check
        %p643 = pneg %p218
      $region78: #{deep_ptm_forward.6} parent=47 // pred_check_branch
        %645 = sbr.rel (%p643) target = $region80
      $region79: #{deep_ptm_forward.6} parent=47 // pred_region
        _
      $region80: #{deep_ptm_forward.6} parent=47 // pred_fallthru
        _
    $region48: #{deep_ptm_forward.6} parent=5 // pred_fallthru
      _
    %p646 = scmp.le.s32.totalorder 2, %s13
    // Predicated region
    $region81: #{deep_ptm_forward.6} parent=5 // pred_check
      %p647 = pneg %p646
    $region82: #{deep_ptm_forward.6} parent=5 // pred_check_branch
      %649 = sbr.rel (%p647) target = $region84
    $region83: #{deep_ptm_forward.6} parent=5 // pred_region
      %s650 = ssub.s32 %s13, 2
      // Predicated region
      $region85: #{deep_ptm_forward.6} parent=83 // pred_check
        %p651 = pneg %p224
      $region86: #{deep_ptm_forward.6} parent=83 // pred_check_branch
        %653 = sbr.rel (%p651) target = $region88
      $region87: #{deep_ptm_forward.6} parent=83 // pred_region
        %p654 = scmp.lt.s32.totalorder %s19, 1
        %s655 = scalar_select %p654, %s19, 1
        %s656 = smul.addr %s655, 8
        %s657 = smul.addr %s656, 2
        %s658 = scalar_lea.vmem %s7, %s657
      $region88: #{deep_ptm_forward.6} parent=83 // pred_fallthru
        _
    $region84: #{deep_ptm_forward.6} parent=5 // pred_fallthru
      _
  $region6: #{deep_ptm_forward.6} parent=0 // loop_footer
    %s17 = sadd.s32 1, %s13
  $region7: #{deep_ptm_forward.6} parent=0 // loop_footer_branch
    %12 = sbr.rel target = $region3
  $region8: #{deep_ptm_forward.6} parent=0 // loop_exit
    _

</llo_original>
